<compile_context>
chip_gen: v6e
topology: v6e:2x2x1
jax: 0.10.0
libtpu: 0.0.40
codegen_flags: <defaults>
</compile_context>

<pallas_src>
import jax
import jax.numpy as jnp
from jax.experimental import pallas as pl
from jax.experimental.pallas import tpu as pltpu

HIDDEN = 64  # hidden_size fixed inside the PyTorch module


def _make_kernel(seq, pb, out_dim):
    """Build the single-invocation dueling-LSTM kernel (static seq / pb)."""
    H = HIDDEN

    def kernel(x_ref,                       # (seq*pb, in_dim)       bf16
               wih_ref, whh_ref, b_ref,     # LSTM params ([i,f,o,g] order, fused bias)
               wf_ref, bf_ref,              # feature layer
               wav1_ref, bav1_ref,          # fused [adv|val] first layer
               wq_ref, bq_ref,              # fused, mean-folded second layer
               q_ref,                       # (seq*pb, out_dim)      f32
               gx_scr,                      # (seq*pb, 4H) f32  -- hoisted x @ W_ih + b
               hh_scr):                     # (seq*pb, H)  f32  -- hidden-state history
        # ---- hoisted input projection for all timesteps + fused LSTM bias ----
        # Parked in VMEM so it does not pin ~16 vregs across the unrolled loop.
        gx_scr[...] = jnp.dot(x_ref[...], wih_ref[...],
                              preferred_element_type=jnp.float32) + b_ref[...]

        h = jnp.zeros((pb, H), jnp.float32)
        c = jnp.zeros((pb, H), jnp.float32)

        # ---- serial recurrence: only h @ W_hh is on the critical path ----
        # Fully unrolled (seq is small & static) so all slices/stores are
        # static and tile-aligned.  gx slice and W_hh are read from VMEM each
        # step (3 vld/cycle) instead of being held live in vregs.
        for t in range(seq):
            gates = gx_scr[t * pb:(t + 1) * pb, :] + jnp.dot(
                h.astype(jnp.bfloat16), whh_ref[...],
                preferred_element_type=jnp.float32)               # (pb, 4H) f32
            # gate order is [i, f, o, g] (reordered host-side):
            # sigmoid only on the first 3H columns, tanh on the last H.
            sg = jax.nn.sigmoid(gates[:, :3 * H])
            i_g = sg[:, 0 * H:1 * H]
            f_g = sg[:, 1 * H:2 * H]
            o_g = sg[:, 2 * H:3 * H]
            g_g = jnp.tanh(gates[:, 3 * H:4 * H])
            c = f_g * c + i_g * g_g
            h = o_g * jnp.tanh(c)
            hh_scr[t * pb:(t + 1) * pb, :] = h                     # aligned rows

        # ---- dueling head, once, over the stacked hidden states ----
        # The mean-subtract / value-broadcast combine is folded into wq/bq
        # host-side, so this is three dense matmuls and a single store.
        h_all = hh_scr[...].astype(jnp.bfloat16)                   # (M, H)
        feat = jnp.maximum(
            jnp.dot(h_all, wf_ref[...], preferred_element_type=jnp.float32)
            + bf_ref[...], 0.0)                                    # (M, L)
        av1 = jnp.maximum(
            jnp.dot(feat.astype(jnp.bfloat16), wav1_ref[...],
                    preferred_element_type=jnp.float32)
            + bav1_ref[...], 0.0)                                  # (M, 2L) = [a1|v1]
        q = jnp.dot(av1.astype(jnp.bfloat16), wq_ref[...],
                    preferred_element_type=jnp.float32) + bq_ref[...]
        q_ref[...] = q.astype(q_ref.dtype)                         # single store

    return kernel


def _reorder_gates(w):
    """Permute the packed 4H gate axis from [i, f, g, o] to [i, f, o, g]."""
    i, f, g, o = jnp.split(w, 4, axis=-1)
    return jnp.concatenate([i, f, o, g], axis=-1)


def lstm_dueling_forward(x, params):
    seq, batch, in_dim = x.shape
    layer_num = params["wf"].shape[1]
    out_dim = params["wa2"].shape[1]
    pb = -(-batch // 8) * 8            # pad batch rows up to the f32 sublane tile

    # --- LSTM params: reorder gates to [i,f,o,g]; weights to bf16, bias f32 ---
    wih = _reorder_gates(params["wih"]).astype(jnp.bfloat16)           # (in, 4H)
    whh = _reorder_gates(params["whh"]).astype(jnp.bfloat16)           # (H, 4H)
    b = _reorder_gates(params["b"])                                    # (1, 4H) f32

    # --- fuse advantage / value first layers ---
    wav1 = jnp.concatenate([params["wa1"], params["wv1"]],
                           axis=1).astype(jnp.bfloat16)                # (L, 2L)
    bav1 = jnp.concatenate([params["ba1"], params["bv1"]], axis=1)     # (1, 2L)

    # --- fold the dueling combine (val + adv - mean(adv)) into layer 2 ---
    #   q = [a1|v1] @ [[wa2 - colmean(wa2)]; [wv2 * 1_out]] + (ba2 - mean(ba2) + bv2)
    wa2c = params["wa2"] - jnp.mean(params["wa2"], axis=1, keepdims=True)
    wv2b = jnp.tile(params["wv2"], (1, out_dim))
    w_q = jnp.concatenate([wa2c, wv2b], axis=0).astype(jnp.bfloat16)   # (2L, out)
    b_q = (params["ba2"] - jnp.mean(params["ba2"], axis=1, keepdims=True)
           + params["bv2"])                                            # (1, out)

    wf = params["wf"].astype(jnp.bfloat16)                             # (H, L)
    bf = params["bf"]                                                  # (1, L)

    # --- pad batch to `pb` rows and fold time into the row dimension ---
    x_pad = jnp.pad(x, ((0, 0), (0, pb - batch), (0, 0)))
    x2d = x_pad.reshape(seq * pb, in_dim).astype(jnp.bfloat16)

    inputs = (x2d, wih, whh, b, wf, bf, wav1, bav1, w_q, b_q)

    vmem_spec = pl.BlockSpec(memory_space=pltpu.MemorySpace.VMEM)
    q_pad = pl.pallas_call(
        _make_kernel(seq, pb, out_dim),
        out_shape=jax.ShapeDtypeStruct((seq * pb, out_dim), jnp.float32),
        in_specs=[vmem_spec] * len(inputs),
        out_specs=vmem_spec,
        scratch_shapes=[pltpu.VMEM((seq * pb, 4 * HIDDEN), jnp.float32),
                        pltpu.VMEM((seq * pb, HIDDEN), jnp.float32)],
        compiler_params=pltpu.CompilerParams(
            vmem_limit_bytes=32 * 1024 * 1024),
    )(*inputs)

    return q_pad.reshape(seq, pb, out_dim)[:, :batch, :]


def init_params(key, in_dim, out_dim, layer_num):
    """Deterministic synthetic parameters (uniform init, roughly PyTorch scale)."""
    ks = jax.random.split(key, 16)

    def u(k, shape, scale):
        return jax.random.uniform(k, shape, jnp.float32, -scale, scale)

    s_lstm = 1.0 / float(HIDDEN) ** 0.5
    s_feat = 1.0 / float(HIDDEN) ** 0.5
    s_head = 1.0 / float(layer_num) ** 0.5
    params = {
        # stored transposed so the kernel can right-multiply; gate order [i,f,g,o]
        # (PyTorch packing) -- reordered to [i,f,o,g] inside the wrapper.
        "wih": u(ks[0], (in_dim, 4 * HIDDEN), s_lstm),
        "whh": u(ks[1], (HIDDEN, 4 * HIDDEN), s_lstm),
        # fused bias: b_ih + b_hh
        "b": u(ks[2], (1, 4 * HIDDEN), s_lstm) + u(ks[3], (1, 4 * HIDDEN), s_lstm),
        "wf": u(ks[4], (HIDDEN, layer_num), s_feat),
        "bf": u(ks[5], (1, layer_num), s_feat),
        "wa1": u(ks[6], (layer_num, layer_num), s_head),
        "ba1": u(ks[7], (1, layer_num), s_head),
        "wa2": u(ks[8], (layer_num, out_dim), s_head),
        "ba2": u(ks[9], (1, out_dim), s_head),
        "wv1": u(ks[10], (layer_num, layer_num), s_head),
        "bv1": u(ks[11], (1, layer_num), s_head),
        "wv2": u(ks[12], (layer_num, 1), s_head),
        "bv2": u(ks[13], (1, 1), s_head),
    }
    return params


def reference_forward(x, p):
    """Pure-JAX f32 reference for correctness checking."""
    seq, batch, _ = x.shape
    h = jnp.zeros((batch, HIDDEN), jnp.float32)
    c = jnp.zeros((batch, HIDDEN), jnp.float32)
    outs = []
    for t in range(seq):
        gates = x[t] @ p["wih"] + h @ p["whh"] + p["b"]
        i = jax.nn.sigmoid(gates[:, :HIDDEN])
        f = jax.nn.sigmoid(gates[:, HIDDEN:2 * HIDDEN])
        g = jnp.tanh(gates[:, 2 * HIDDEN:3 * HIDDEN])
        o = jax.nn.sigmoid(gates[:, 3 * HIDDEN:])
        c = f * c + i * g
        h = o * jnp.tanh(c)
        outs.append(h)
    hs = jnp.stack(outs)                                  # (seq, batch, HIDDEN)
    feat = jax.nn.relu(hs @ p["wf"] + p["bf"])
    adv = jax.nn.relu(feat @ p["wa1"] + p["ba1"]) @ p["wa2"] + p["ba2"]
    val = jax.nn.relu(feat @ p["wv1"] + p["bv1"]) @ p["wv2"] + p["bv2"]
    return val + adv - adv.mean(-1, keepdims=True)


if __name__ == "__main__":
    seq, batch, in_dim = 8, 2, 16
    layer_num, out_dim = 32, 8

    key = jax.random.PRNGKey(0)
    k_x, k_p = jax.random.split(key)
    x = jax.random.normal(k_x, (seq, batch, in_dim), jnp.float32)
    params = init_params(k_p, in_dim, out_dim, layer_num)

    q = lstm_dueling_forward(x, params)
    q = jax.block_until_ready(q)

    q_ref = reference_forward(x, params)
    assert q.shape == (seq, batch, out_dim)
    # Kernel feeds the MXU with bf16 operands (f32 accumulation); the reference
    # is all-f32, so allow a bf16-rounding-sized tolerance.
    assert jnp.max(jnp.abs(q - q_ref)) < 2e-2, "mismatch vs pure-JAX reference"

    print("KERNEL_OK")
</pallas_src>

<mosaic_0001>
module attributes {stable_mosaic.version = 11 : i64} {
  func.func @kernel(%arg0: memref<64x16xbf16, #tpu.memory_space<vmem>>, %arg1: memref<16x256xbf16, #tpu.memory_space<vmem>>, %arg2: memref<64x256xbf16, #tpu.memory_space<vmem>>, %arg3: memref<1x256xf32, #tpu.memory_space<vmem>>, %arg4: memref<64x32xbf16, #tpu.memory_space<vmem>>, %arg5: memref<1x32xf32, #tpu.memory_space<vmem>>, %arg6: memref<32x64xbf16, #tpu.memory_space<vmem>>, %arg7: memref<1x64xf32, #tpu.memory_space<vmem>>, %arg8: memref<64x8xbf16, #tpu.memory_space<vmem>>, %arg9: memref<1x8xf32, #tpu.memory_space<vmem>>, %arg10: memref<64x8xf32, #tpu.memory_space<vmem>>, %arg11: memref<64x256xf32, #tpu.memory_space<vmem>>, %arg12: memref<64x64xf32, #tpu.memory_space<vmem>>) attributes {dimension_semantics = [], scalar_prefetch = 0 : i64, scratch_operands = 2 : i64, tpu.core_type = #tpu.core_type<tc>} {
    %c0 = arith.constant 0 : index
    %c0_0 = arith.constant 0 : index
    %0 = vector.load %arg0[%c0, %c0_0] : memref<64x16xbf16, #tpu.memory_space<vmem>>, vector<64x16xbf16>
    %c0_1 = arith.constant 0 : index
    %c0_2 = arith.constant 0 : index
    %1 = vector.load %arg1[%c0_1, %c0_2] : memref<16x256xbf16, #tpu.memory_space<vmem>>, vector<16x256xbf16>
    %cst = arith.constant dense<0.000000e+00> : vector<64x256xf32>
    %2 = tpu.matmul %0, %1, %cst {dimension_numbers = #tpu.dot_dimension_numbers<[1], [0], [0], [1], [0, 0, 1, 1], [], []>} : vector<64x16xbf16>, vector<16x256xbf16>, vector<64x256xf32> -> vector<64x256xf32>
    %c0_3 = arith.constant 0 : index
    %c0_4 = arith.constant 0 : index
    %3 = vector.load %arg3[%c0_3, %c0_4] : memref<1x256xf32, #tpu.memory_space<vmem>>, vector<1x256xf32>
    %4 = vector.broadcast %3 : vector<1x256xf32> to vector<64x256xf32>
    %5 = arith.addf %2, %4 : vector<64x256xf32>
    %c0_5 = arith.constant 0 : index
    %c0_6 = arith.constant 0 : index
    %6 = vector.load %arg11[%c0_5, %c0_6] : memref<64x256xf32, #tpu.memory_space<vmem>>, vector<64x256xf32>
    tpu.vector_store %arg11[%c0_5, %c0_6], %5 {strides = array<i32>} : memref<64x256xf32, #tpu.memory_space<vmem>>, vector<64x256xf32>,
    %cst_7 = arith.constant 0.000000e+00 : f32
    %7 = vector.broadcast %cst_7 : f32 to vector<8x64xf32>
    %cst_8 = arith.constant 0.000000e+00 : f32
    %8 = vector.broadcast %cst_8 : f32 to vector<8x64xf32>
    %c0_9 = arith.constant 0 : index
    %c0_10 = arith.constant 0 : index
    %9 = vector.load %arg11[%c0_9, %c0_10] : memref<64x256xf32, #tpu.memory_space<vmem>>, vector<8x256xf32>
    %10 = arith.truncf %7 : vector<8x64xf32> to vector<8x64xbf16>
    %c0_11 = arith.constant 0 : index
    %c0_12 = arith.constant 0 : index
    %11 = vector.load %arg2[%c0_11, %c0_12] : memref<64x256xbf16, #tpu.memory_space<vmem>>, vector<64x256xbf16>
    %cst_13 = arith.constant dense<0.000000e+00> : vector<8x256xf32>
    %12 = tpu.matmul %10, %11, %cst_13 {dimension_numbers = #tpu.dot_dimension_numbers<[1], [0], [0], [1], [0, 0, 1, 1], [], []>} : vector<8x64xbf16>, vector<64x256xbf16>, vector<8x256xf32> -> vector<8x256xf32>
    %13 = arith.addf %9, %12 : vector<8x256xf32>
    %14 = vector.extract_strided_slice %13 {offsets = [0, 0], sizes = [8, 192], strides = [1, 1]} : vector<8x256xf32> to vector<8x192xf32>
    %15 = arith.negf %14 : vector<8x192xf32>
    %16 = math.exp %15 : vector<8x192xf32>
    %cst_14 = arith.constant 1.000000e+00 : f32
    %17 = vector.broadcast %cst_14 : f32 to vector<8x192xf32>
    %18 = arith.addf %17, %16 : vector<8x192xf32>
    %19 = arith.divf %17, %18 : vector<8x192xf32>
    %20 = vector.extract_strided_slice %19 {offsets = [0, 0], sizes = [8, 64], strides = [1, 1]} : vector<8x192xf32> to vector<8x64xf32>
    %21 = vector.extract_strided_slice %19 {offsets = [0, 64], sizes = [8, 64], strides = [1, 1]} : vector<8x192xf32> to vector<8x64xf32>
    %22 = vector.extract_strided_slice %19 {offsets = [0, 128], sizes = [8, 64], strides = [1, 1]} : vector<8x192xf32> to vector<8x64xf32>
    %23 = vector.extract_strided_slice %13 {offsets = [0, 192], sizes = [8, 64], strides = [1, 1]} : vector<8x256xf32> to vector<8x64xf32>
    %24 = math.tanh %23 : vector<8x64xf32>
    %25 = arith.mulf %21, %8 : vector<8x64xf32>
    %26 = arith.mulf %20, %24 : vector<8x64xf32>
    %27 = arith.addf %25, %26 : vector<8x64xf32>
    %28 = math.tanh %27 : vector<8x64xf32>
    %29 = arith.mulf %22, %28 : vector<8x64xf32>
    %c0_15 = arith.constant 0 : index
    %c0_16 = arith.constant 0 : index
    %30 = vector.load %arg12[%c0_15, %c0_16] : memref<64x64xf32, #tpu.memory_space<vmem>>, vector<8x64xf32>
    tpu.vector_store %arg12[%c0_15, %c0_16], %29 {strides = array<i32>} : memref<64x64xf32, #tpu.memory_space<vmem>>, vector<8x64xf32>,
    %c8 = arith.constant 8 : index
    %c0_17 = arith.constant 0 : index
    %31 = vector.load %arg11[%c8, %c0_17] : memref<64x256xf32, #tpu.memory_space<vmem>>, vector<8x256xf32>
    %32 = arith.truncf %29 : vector<8x64xf32> to vector<8x64xbf16>
    %c0_18 = arith.constant 0 : index
    %c0_19 = arith.constant 0 : index
    %33 = vector.load %arg2[%c0_18, %c0_19] : memref<64x256xbf16, #tpu.memory_space<vmem>>, vector<64x256xbf16>
    %cst_20 = arith.constant dense<0.000000e+00> : vector<8x256xf32>
    %34 = tpu.matmul %32, %33, %cst_20 {dimension_numbers = #tpu.dot_dimension_numbers<[1], [0], [0], [1], [0, 0, 1, 1], [], []>} : vector<8x64xbf16>, vector<64x256xbf16>, vector<8x256xf32> -> vector<8x256xf32>
    %35 = arith.addf %31, %34 : vector<8x256xf32>
    %36 = vector.extract_strided_slice %35 {offsets = [0, 0], sizes = [8, 192], strides = [1, 1]} : vector<8x256xf32> to vector<8x192xf32>
    %37 = arith.negf %36 : vector<8x192xf32>
    %38 = math.exp %37 : vector<8x192xf32>
    %cst_21 = arith.constant 1.000000e+00 : f32
    %39 = vector.broadcast %cst_21 : f32 to vector<8x192xf32>
    %40 = arith.addf %39, %38 : vector<8x192xf32>
    %41 = arith.divf %39, %40 : vector<8x192xf32>
    %42 = vector.extract_strided_slice %41 {offsets = [0, 0], sizes = [8, 64], strides = [1, 1]} : vector<8x192xf32> to vector<8x64xf32>
    %43 = vector.extract_strided_slice %41 {offsets = [0, 64], sizes = [8, 64], strides = [1, 1]} : vector<8x192xf32> to vector<8x64xf32>
    %44 = vector.extract_strided_slice %41 {offsets = [0, 128], sizes = [8, 64], strides = [1, 1]} : vector<8x192xf32> to vector<8x64xf32>
    %45 = vector.extract_strided_slice %35 {offsets = [0, 192], sizes = [8, 64], strides = [1, 1]} : vector<8x256xf32> to vector<8x64xf32>
    %46 = math.tanh %45 : vector<8x64xf32>
    %47 = arith.mulf %43, %27 : vector<8x64xf32>
    %48 = arith.mulf %42, %46 : vector<8x64xf32>
    %49 = arith.addf %47, %48 : vector<8x64xf32>
    %50 = math.tanh %49 : vector<8x64xf32>
    %51 = arith.mulf %44, %50 : vector<8x64xf32>
    %c8_22 = arith.constant 8 : index
    %c0_23 = arith.constant 0 : index
    %52 = vector.load %arg12[%c8_22, %c0_23] : memref<64x64xf32, #tpu.memory_space<vmem>>, vector<8x64xf32>
    tpu.vector_store %arg12[%c8_22, %c0_23], %51 {strides = array<i32>} : memref<64x64xf32, #tpu.memory_space<vmem>>, vector<8x64xf32>,
    %c16 = arith.constant 16 : index
    %c0_24 = arith.constant 0 : index
    %53 = vector.load %arg11[%c16, %c0_24] : memref<64x256xf32, #tpu.memory_space<vmem>>, vector<8x256xf32>
    %54 = arith.truncf %51 : vector<8x64xf32> to vector<8x64xbf16>
    %c0_25 = arith.constant 0 : index
    %c0_26 = arith.constant 0 : index
    %55 = vector.load %arg2[%c0_25, %c0_26] : memref<64x256xbf16, #tpu.memory_space<vmem>>, vector<64x256xbf16>
    %cst_27 = arith.constant dense<0.000000e+00> : vector<8x256xf32>
    %56 = tpu.matmul %54, %55, %cst_27 {dimension_numbers = #tpu.dot_dimension_numbers<[1], [0], [0], [1], [0, 0, 1, 1], [], []>} : vector<8x64xbf16>, vector<64x256xbf16>, vector<8x256xf32> -> vector<8x256xf32>
    %57 = arith.addf %53, %56 : vector<8x256xf32>
    %58 = vector.extract_strided_slice %57 {offsets = [0, 0], sizes = [8, 192], strides = [1, 1]} : vector<8x256xf32> to vector<8x192xf32>
    %59 = arith.negf %58 : vector<8x192xf32>
    %60 = math.exp %59 : vector<8x192xf32>
    %cst_28 = arith.constant 1.000000e+00 : f32
    %61 = vector.broadcast %cst_28 : f32 to vector<8x192xf32>
    %62 = arith.addf %61, %60 : vector<8x192xf32>
    %63 = arith.divf %61, %62 : vector<8x192xf32>
    %64 = vector.extract_strided_slice %63 {offsets = [0, 0], sizes = [8, 64], strides = [1, 1]} : vector<8x192xf32> to vector<8x64xf32>
    %65 = vector.extract_strided_slice %63 {offsets = [0, 64], sizes = [8, 64], strides = [1, 1]} : vector<8x192xf32> to vector<8x64xf32>
    %66 = vector.extract_strided_slice %63 {offsets = [0, 128], sizes = [8, 64], strides = [1, 1]} : vector<8x192xf32> to vector<8x64xf32>
    %67 = vector.extract_strided_slice %57 {offsets = [0, 192], sizes = [8, 64], strides = [1, 1]} : vector<8x256xf32> to vector<8x64xf32>
    %68 = math.tanh %67 : vector<8x64xf32>
    %69 = arith.mulf %65, %49 : vector<8x64xf32>
    %70 = arith.mulf %64, %68 : vector<8x64xf32>
    %71 = arith.addf %69, %70 : vector<8x64xf32>
    %72 = math.tanh %71 : vector<8x64xf32>
    %73 = arith.mulf %66, %72 : vector<8x64xf32>
    %c16_29 = arith.constant 16 : index
    %c0_30 = arith.constant 0 : index
    %74 = vector.load %arg12[%c16_29, %c0_30] : memref<64x64xf32, #tpu.memory_space<vmem>>, vector<8x64xf32>
    tpu.vector_store %arg12[%c16_29, %c0_30], %73 {strides = array<i32>} : memref<64x64xf32, #tpu.memory_space<vmem>>, vector<8x64xf32>,
    %c24 = arith.constant 24 : index
    %c0_31 = arith.constant 0 : index
    %75 = vector.load %arg11[%c24, %c0_31] : memref<64x256xf32, #tpu.memory_space<vmem>>, vector<8x256xf32>
    %76 = arith.truncf %73 : vector<8x64xf32> to vector<8x64xbf16>
    %c0_32 = arith.constant 0 : index
    %c0_33 = arith.constant 0 : index
    %77 = vector.load %arg2[%c0_32, %c0_33] : memref<64x256xbf16, #tpu.memory_space<vmem>>, vector<64x256xbf16>
    %cst_34 = arith.constant dense<0.000000e+00> : vector<8x256xf32>
    %78 = tpu.matmul %76, %77, %cst_34 {dimension_numbers = #tpu.dot_dimension_numbers<[1], [0], [0], [1], [0, 0, 1, 1], [], []>} : vector<8x64xbf16>, vector<64x256xbf16>, vector<8x256xf32> -> vector<8x256xf32>
    %79 = arith.addf %75, %78 : vector<8x256xf32>
    %80 = vector.extract_strided_slice %79 {offsets = [0, 0], sizes = [8, 192], strides = [1, 1]} : vector<8x256xf32> to vector<8x192xf32>
    %81 = arith.negf %80 : vector<8x192xf32>
    %82 = math.exp %81 : vector<8x192xf32>
    %cst_35 = arith.constant 1.000000e+00 : f32
    %83 = vector.broadcast %cst_35 : f32 to vector<8x192xf32>
    %84 = arith.addf %83, %82 : vector<8x192xf32>
    %85 = arith.divf %83, %84 : vector<8x192xf32>
    %86 = vector.extract_strided_slice %85 {offsets = [0, 0], sizes = [8, 64], strides = [1, 1]} : vector<8x192xf32> to vector<8x64xf32>
    %87 = vector.extract_strided_slice %85 {offsets = [0, 64], sizes = [8, 64], strides = [1, 1]} : vector<8x192xf32> to vector<8x64xf32>
    %88 = vector.extract_strided_slice %85 {offsets = [0, 128], sizes = [8, 64], strides = [1, 1]} : vector<8x192xf32> to vector<8x64xf32>
    %89 = vector.extract_strided_slice %79 {offsets = [0, 192], sizes = [8, 64], strides = [1, 1]} : vector<8x256xf32> to vector<8x64xf32>
    %90 = math.tanh %89 : vector<8x64xf32>
    %91 = arith.mulf %87, %71 : vector<8x64xf32>
    %92 = arith.mulf %86, %90 : vector<8x64xf32>
    %93 = arith.addf %91, %92 : vector<8x64xf32>
    %94 = math.tanh %93 : vector<8x64xf32>
    %95 = arith.mulf %88, %94 : vector<8x64xf32>
    %c24_36 = arith.constant 24 : index
    %c0_37 = arith.constant 0 : index
    %96 = vector.load %arg12[%c24_36, %c0_37] : memref<64x64xf32, #tpu.memory_space<vmem>>, vector<8x64xf32>
    tpu.vector_store %arg12[%c24_36, %c0_37], %95 {strides = array<i32>} : memref<64x64xf32, #tpu.memory_space<vmem>>, vector<8x64xf32>,
    %c32 = arith.constant 32 : index
    %c0_38 = arith.constant 0 : index
    %97 = vector.load %arg11[%c32, %c0_38] : memref<64x256xf32, #tpu.memory_space<vmem>>, vector<8x256xf32>
    %98 = arith.truncf %95 : vector<8x64xf32> to vector<8x64xbf16>
    %c0_39 = arith.constant 0 : index
    %c0_40 = arith.constant 0 : index
    %99 = vector.load %arg2[%c0_39, %c0_40] : memref<64x256xbf16, #tpu.memory_space<vmem>>, vector<64x256xbf16>
    %cst_41 = arith.constant dense<0.000000e+00> : vector<8x256xf32>
    %100 = tpu.matmul %98, %99, %cst_41 {dimension_numbers = #tpu.dot_dimension_numbers<[1], [0], [0], [1], [0, 0, 1, 1], [], []>} : vector<8x64xbf16>, vector<64x256xbf16>, vector<8x256xf32> -> vector<8x256xf32>
    %101 = arith.addf %97, %100 : vector<8x256xf32>
    %102 = vector.extract_strided_slice %101 {offsets = [0, 0], sizes = [8, 192], strides = [1, 1]} : vector<8x256xf32> to vector<8x192xf32>
    %103 = arith.negf %102 : vector<8x192xf32>
    %104 = math.exp %103 : vector<8x192xf32>
    %cst_42 = arith.constant 1.000000e+00 : f32
    %105 = vector.broadcast %cst_42 : f32 to vector<8x192xf32>
    %106 = arith.addf %105, %104 : vector<8x192xf32>
    %107 = arith.divf %105, %106 : vector<8x192xf32>
    %108 = vector.extract_strided_slice %107 {offsets = [0, 0], sizes = [8, 64], strides = [1, 1]} : vector<8x192xf32> to vector<8x64xf32>
    %109 = vector.extract_strided_slice %107 {offsets = [0, 64], sizes = [8, 64], strides = [1, 1]} : vector<8x192xf32> to vector<8x64xf32>
    %110 = vector.extract_strided_slice %107 {offsets = [0, 128], sizes = [8, 64], strides = [1, 1]} : vector<8x192xf32> to vector<8x64xf32>
    %111 = vector.extract_strided_slice %101 {offsets = [0, 192], sizes = [8, 64], strides = [1, 1]} : vector<8x256xf32> to vector<8x64xf32>
    %112 = math.tanh %111 : vector<8x64xf32>
    %113 = arith.mulf %109, %93 : vector<8x64xf32>
    %114 = arith.mulf %108, %112 : vector<8x64xf32>
    %115 = arith.addf %113, %114 : vector<8x64xf32>
    %116 = math.tanh %115 : vector<8x64xf32>
    %117 = arith.mulf %110, %116 : vector<8x64xf32>
    %c32_43 = arith.constant 32 : index
    %c0_44 = arith.constant 0 : index
    %118 = vector.load %arg12[%c32_43, %c0_44] : memref<64x64xf32, #tpu.memory_space<vmem>>, vector<8x64xf32>
    tpu.vector_store %arg12[%c32_43, %c0_44], %117 {strides = array<i32>} : memref<64x64xf32, #tpu.memory_space<vmem>>, vector<8x64xf32>,
    %c40 = arith.constant 40 : index
    %c0_45 = arith.constant 0 : index
    %119 = vector.load %arg11[%c40, %c0_45] : memref<64x256xf32, #tpu.memory_space<vmem>>, vector<8x256xf32>
    %120 = arith.truncf %117 : vector<8x64xf32> to vector<8x64xbf16>
    %c0_46 = arith.constant 0 : index
    %c0_47 = arith.constant 0 : index
    %121 = vector.load %arg2[%c0_46, %c0_47] : memref<64x256xbf16, #tpu.memory_space<vmem>>, vector<64x256xbf16>
    %cst_48 = arith.constant dense<0.000000e+00> : vector<8x256xf32>
    %122 = tpu.matmul %120, %121, %cst_48 {dimension_numbers = #tpu.dot_dimension_numbers<[1], [0], [0], [1], [0, 0, 1, 1], [], []>} : vector<8x64xbf16>, vector<64x256xbf16>, vector<8x256xf32> -> vector<8x256xf32>
    %123 = arith.addf %119, %122 : vector<8x256xf32>
    %124 = vector.extract_strided_slice %123 {offsets = [0, 0], sizes = [8, 192], strides = [1, 1]} : vector<8x256xf32> to vector<8x192xf32>
    %125 = arith.negf %124 : vector<8x192xf32>
    %126 = math.exp %125 : vector<8x192xf32>
    %cst_49 = arith.constant 1.000000e+00 : f32
    %127 = vector.broadcast %cst_49 : f32 to vector<8x192xf32>
    %128 = arith.addf %127, %126 : vector<8x192xf32>
    %129 = arith.divf %127, %128 : vector<8x192xf32>
    %130 = vector.extract_strided_slice %129 {offsets = [0, 0], sizes = [8, 64], strides = [1, 1]} : vector<8x192xf32> to vector<8x64xf32>
    %131 = vector.extract_strided_slice %129 {offsets = [0, 64], sizes = [8, 64], strides = [1, 1]} : vector<8x192xf32> to vector<8x64xf32>
    %132 = vector.extract_strided_slice %129 {offsets = [0, 128], sizes = [8, 64], strides = [1, 1]} : vector<8x192xf32> to vector<8x64xf32>
    %133 = vector.extract_strided_slice %123 {offsets = [0, 192], sizes = [8, 64], strides = [1, 1]} : vector<8x256xf32> to vector<8x64xf32>
    %134 = math.tanh %133 : vector<8x64xf32>
    %135 = arith.mulf %131, %115 : vector<8x64xf32>
    %136 = arith.mulf %130, %134 : vector<8x64xf32>
    %137 = arith.addf %135, %136 : vector<8x64xf32>
    %138 = math.tanh %137 : vector<8x64xf32>
    %139 = arith.mulf %132, %138 : vector<8x64xf32>
    %c40_50 = arith.constant 40 : index
    %c0_51 = arith.constant 0 : index
    %140 = vector.load %arg12[%c40_50, %c0_51] : memref<64x64xf32, #tpu.memory_space<vmem>>, vector<8x64xf32>
    tpu.vector_store %arg12[%c40_50, %c0_51], %139 {strides = array<i32>} : memref<64x64xf32, #tpu.memory_space<vmem>>, vector<8x64xf32>,
    %c48 = arith.constant 48 : index
    %c0_52 = arith.constant 0 : index
    %141 = vector.load %arg11[%c48, %c0_52] : memref<64x256xf32, #tpu.memory_space<vmem>>, vector<8x256xf32>
    %142 = arith.truncf %139 : vector<8x64xf32> to vector<8x64xbf16>
    %c0_53 = arith.constant 0 : index
    %c0_54 = arith.constant 0 : index
    %143 = vector.load %arg2[%c0_53, %c0_54] : memref<64x256xbf16, #tpu.memory_space<vmem>>, vector<64x256xbf16>
    %cst_55 = arith.constant dense<0.000000e+00> : vector<8x256xf32>
    %144 = tpu.matmul %142, %143, %cst_55 {dimension_numbers = #tpu.dot_dimension_numbers<[1], [0], [0], [1], [0, 0, 1, 1], [], []>} : vector<8x64xbf16>, vector<64x256xbf16>, vector<8x256xf32> -> vector<8x256xf32>
    %145 = arith.addf %141, %144 : vector<8x256xf32>
    %146 = vector.extract_strided_slice %145 {offsets = [0, 0], sizes = [8, 192], strides = [1, 1]} : vector<8x256xf32> to vector<8x192xf32>
    %147 = arith.negf %146 : vector<8x192xf32>
    %148 = math.exp %147 : vector<8x192xf32>
    %cst_56 = arith.constant 1.000000e+00 : f32
    %149 = vector.broadcast %cst_56 : f32 to vector<8x192xf32>
    %150 = arith.addf %149, %148 : vector<8x192xf32>
    %151 = arith.divf %149, %150 : vector<8x192xf32>
    %152 = vector.extract_strided_slice %151 {offsets = [0, 0], sizes = [8, 64], strides = [1, 1]} : vector<8x192xf32> to vector<8x64xf32>
    %153 = vector.extract_strided_slice %151 {offsets = [0, 64], sizes = [8, 64], strides = [1, 1]} : vector<8x192xf32> to vector<8x64xf32>
    %154 = vector.extract_strided_slice %151 {offsets = [0, 128], sizes = [8, 64], strides = [1, 1]} : vector<8x192xf32> to vector<8x64xf32>
    %155 = vector.extract_strided_slice %145 {offsets = [0, 192], sizes = [8, 64], strides = [1, 1]} : vector<8x256xf32> to vector<8x64xf32>
    %156 = math.tanh %155 : vector<8x64xf32>
    %157 = arith.mulf %153, %137 : vector<8x64xf32>
    %158 = arith.mulf %152, %156 : vector<8x64xf32>
    %159 = arith.addf %157, %158 : vector<8x64xf32>
    %160 = math.tanh %159 : vector<8x64xf32>
    %161 = arith.mulf %154, %160 : vector<8x64xf32>
    %c48_57 = arith.constant 48 : index
    %c0_58 = arith.constant 0 : index
    %162 = vector.load %arg12[%c48_57, %c0_58] : memref<64x64xf32, #tpu.memory_space<vmem>>, vector<8x64xf32>
    tpu.vector_store %arg12[%c48_57, %c0_58], %161 {strides = array<i32>} : memref<64x64xf32, #tpu.memory_space<vmem>>, vector<8x64xf32>,
    %c56 = arith.constant 56 : index
    %c0_59 = arith.constant 0 : index
    %163 = vector.load %arg11[%c56, %c0_59] : memref<64x256xf32, #tpu.memory_space<vmem>>, vector<8x256xf32>
    %164 = arith.truncf %161 : vector<8x64xf32> to vector<8x64xbf16>
    %c0_60 = arith.constant 0 : index
    %c0_61 = arith.constant 0 : index
    %165 = vector.load %arg2[%c0_60, %c0_61] : memref<64x256xbf16, #tpu.memory_space<vmem>>, vector<64x256xbf16>
    %cst_62 = arith.constant dense<0.000000e+00> : vector<8x256xf32>
    %166 = tpu.matmul %164, %165, %cst_62 {dimension_numbers = #tpu.dot_dimension_numbers<[1], [0], [0], [1], [0, 0, 1, 1], [], []>} : vector<8x64xbf16>, vector<64x256xbf16>, vector<8x256xf32> -> vector<8x256xf32>
    %167 = arith.addf %163, %166 : vector<8x256xf32>
    %168 = vector.extract_strided_slice %167 {offsets = [0, 0], sizes = [8, 192], strides = [1, 1]} : vector<8x256xf32> to vector<8x192xf32>
    %169 = arith.negf %168 : vector<8x192xf32>
    %170 = math.exp %169 : vector<8x192xf32>
    %cst_63 = arith.constant 1.000000e+00 : f32
    %171 = vector.broadcast %cst_63 : f32 to vector<8x192xf32>
    %172 = arith.addf %171, %170 : vector<8x192xf32>
    %173 = arith.divf %171, %172 : vector<8x192xf32>
    %174 = vector.extract_strided_slice %173 {offsets = [0, 0], sizes = [8, 64], strides = [1, 1]} : vector<8x192xf32> to vector<8x64xf32>
    %175 = vector.extract_strided_slice %173 {offsets = [0, 64], sizes = [8, 64], strides = [1, 1]} : vector<8x192xf32> to vector<8x64xf32>
    %176 = vector.extract_strided_slice %173 {offsets = [0, 128], sizes = [8, 64], strides = [1, 1]} : vector<8x192xf32> to vector<8x64xf32>
    %177 = vector.extract_strided_slice %167 {offsets = [0, 192], sizes = [8, 64], strides = [1, 1]} : vector<8x256xf32> to vector<8x64xf32>
    %178 = math.tanh %177 : vector<8x64xf32>
    %179 = arith.mulf %175, %159 : vector<8x64xf32>
    %180 = arith.mulf %174, %178 : vector<8x64xf32>
    %181 = arith.addf %179, %180 : vector<8x64xf32>
    %182 = math.tanh %181 : vector<8x64xf32>
    %183 = arith.mulf %176, %182 : vector<8x64xf32>
    %c56_64 = arith.constant 56 : index
    %c0_65 = arith.constant 0 : index
    %184 = vector.load %arg12[%c56_64, %c0_65] : memref<64x64xf32, #tpu.memory_space<vmem>>, vector<8x64xf32>
    tpu.vector_store %arg12[%c56_64, %c0_65], %183 {strides = array<i32>} : memref<64x64xf32, #tpu.memory_space<vmem>>, vector<8x64xf32>,
    %c0_66 = arith.constant 0 : index
    %c0_67 = arith.constant 0 : index
    %185 = vector.load %arg12[%c0_66, %c0_67] : memref<64x64xf32, #tpu.memory_space<vmem>>, vector<64x64xf32>
    %186 = arith.truncf %185 : vector<64x64xf32> to vector<64x64xbf16>
    %c0_68 = arith.constant 0 : index
    %c0_69 = arith.constant 0 : index
    %187 = vector.load %arg4[%c0_68, %c0_69] : memref<64x32xbf16, #tpu.memory_space<vmem>>, vector<64x32xbf16>
    %cst_70 = arith.constant dense<0.000000e+00> : vector<64x32xf32>
    %188 = tpu.matmul %186, %187, %cst_70 {dimension_numbers = #tpu.dot_dimension_numbers<[1], [0], [0], [1], [0, 0, 1, 1], [], []>} : vector<64x64xbf16>, vector<64x32xbf16>, vector<64x32xf32> -> vector<64x32xf32>
    %c0_71 = arith.constant 0 : index
    %c0_72 = arith.constant 0 : index
    %189 = vector.load %arg5[%c0_71, %c0_72] : memref<1x32xf32, #tpu.memory_space<vmem>>, vector<1x32xf32>
    %190 = vector.broadcast %189 : vector<1x32xf32> to vector<64x32xf32>
    %191 = arith.addf %188, %190 : vector<64x32xf32>
    %cst_73 = arith.constant 0.000000e+00 : f32
    %192 = vector.broadcast %cst_73 : f32 to vector<64x32xf32>
    %193 = arith.maximumf %191, %192 : vector<64x32xf32>
    %194 = arith.truncf %193 : vector<64x32xf32> to vector<64x32xbf16>
    %c0_74 = arith.constant 0 : index
    %c0_75 = arith.constant 0 : index
    %195 = vector.load %arg6[%c0_74, %c0_75] : memref<32x64xbf16, #tpu.memory_space<vmem>>, vector<32x64xbf16>
    %cst_76 = arith.constant dense<0.000000e+00> : vector<64x64xf32>
    %196 = tpu.matmul %194, %195, %cst_76 {dimension_numbers = #tpu.dot_dimension_numbers<[1], [0], [0], [1], [0, 0, 1, 1], [], []>} : vector<64x32xbf16>, vector<32x64xbf16>, vector<64x64xf32> -> vector<64x64xf32>
    %c0_77 = arith.constant 0 : index
    %c0_78 = arith.constant 0 : index
    %197 = vector.load %arg7[%c0_77, %c0_78] : memref<1x64xf32, #tpu.memory_space<vmem>>, vector<1x64xf32>
    %198 = vector.broadcast %197 : vector<1x64xf32> to vector<64x64xf32>
    %199 = arith.addf %196, %198 : vector<64x64xf32>
    %cst_79 = arith.constant 0.000000e+00 : f32
    %200 = vector.broadcast %cst_79 : f32 to vector<64x64xf32>
    %201 = arith.maximumf %199, %200 : vector<64x64xf32>
    %202 = arith.truncf %201 : vector<64x64xf32> to vector<64x64xbf16>
    %c0_80 = arith.constant 0 : index
    %c0_81 = arith.constant 0 : index
    %203 = vector.load %arg8[%c0_80, %c0_81] : memref<64x8xbf16, #tpu.memory_space<vmem>>, vector<64x8xbf16>
    %cst_82 = arith.constant dense<0.000000e+00> : vector<64x8xf32>
    %204 = tpu.matmul %202, %203, %cst_82 {dimension_numbers = #tpu.dot_dimension_numbers<[1], [0], [0], [1], [0, 0, 1, 1], [], []>} : vector<64x64xbf16>, vector<64x8xbf16>, vector<64x8xf32> -> vector<64x8xf32>
    %c0_83 = arith.constant 0 : index
    %c0_84 = arith.constant 0 : index
    %205 = vector.load %arg9[%c0_83, %c0_84] : memref<1x8xf32, #tpu.memory_space<vmem>>, vector<1x8xf32>
    %206 = vector.broadcast %205 : vector<1x8xf32> to vector<64x8xf32>
    %207 = arith.addf %204, %206 : vector<64x8xf32>
    %c0_85 = arith.constant 0 : index
    %c0_86 = arith.constant 0 : index
    %208 = vector.load %arg10[%c0_85, %c0_86] : memref<64x8xf32, #tpu.memory_space<vmem>>, vector<64x8xf32>
    tpu.vector_store %arg10[%c0_85, %c0_86], %207 {strides = array<i32>} : memref<64x8xf32, #tpu.memory_space<vmem>>, vector<64x8xf32>,
    return
  }
}

</mosaic_0001>

<llo_original>
// kernel: tpu_custom_call.1
$region0: #{tpu_custom_call.1}
  #allocation0 [shape = 'u32[]', space=smem, size = 0x4, offset = 0x4, fixed_abs, tag = 'smem constant byte address 0x4 - core index']
  #allocation1 [shape = 'u32[144,128]{1,0:T(1,128)}', space=vmem, size = 0x12000, scoped, tag = 'internal scratch']
  #allocation2 [shape = 'f32[64,256]{1,0:T(8,128)}', space=vmem, size = 0x10000, scoped, tag = 'scratch operand']
  #allocation3 [shape = 'f32[64,64]{1,0:T(8,128)}', space=vmem, size = 0x8000, scoped, tag = 'scratch operand']
  %s0 = inlined_call_operand.vmem [shape: bf16[64,16], index: 0, kind: input, shape index: {}]
  %s1 = inlined_call_operand.vmem [shape: bf16[16,256], index: 1, kind: input, shape index: {}]
  %s2 = inlined_call_operand.vmem [shape: bf16[64,256], index: 2, kind: input, shape index: {}]
  %s3 = inlined_call_operand.vmem [shape: f32[1,256], index: 3, kind: input, shape index: {}]
  %s4 = inlined_call_operand.vmem [shape: bf16[64,32], index: 4, kind: input, shape index: {}]
  %s5 = inlined_call_operand.vmem [shape: f32[1,32], index: 5, kind: input, shape index: {}]
  %s6 = inlined_call_operand.vmem [shape: bf16[32,64], index: 6, kind: input, shape index: {}]
  %s7 = inlined_call_operand.vmem [shape: f32[1,64], index: 7, kind: input, shape index: {}]
  %s8 = inlined_call_operand.vmem [shape: bf16[64,8], index: 8, kind: input, shape index: {}]
  %s9 = inlined_call_operand.vmem [shape: f32[1,8], index: 9, kind: input, shape index: {}]
  %s10 = inlined_call_operand.vmem [shape: f32[64,8], index: 10, kind: output, shape index: {}]
  %s11 = sld [smem:[#allocation0]]
  $region50: #{tpu_custom_call.1} parent=0
    _
  %s13 = ssub.s32 1, %s11
  %s14 = scalar_select 0, %s13, %s11
  // Predicated region
  $region2: #{tpu_custom_call.1} parent=0 // pred_check
    _
  $region3: #{tpu_custom_call.1} parent=0 // pred_check_branch
    %16 = sbr.rel (0) target = $region5
  $region4: #{tpu_custom_call.1} parent=0 // pred_region
    _
  $region5: #{tpu_custom_call.1} parent=0 // pred_fallthru
    _
  // Predicated region
  $region6: #{tpu_custom_call.1} parent=0 // pred_check
    _
  $region7: #{tpu_custom_call.1} parent=0 // pred_check_branch
    %18 = sbr.rel (0) target = $region9
  $region8: #{tpu_custom_call.1} parent=0 // pred_region
    _
  $region9: #{tpu_custom_call.1} parent=0 // pred_fallthru
    _
  // Predicated region
  $region10: #{tpu_custom_call.1} parent=0 // pred_check
    _
  $region11: #{tpu_custom_call.1} parent=0 // pred_check_branch
    %20 = sbr.rel (0) target = $region13
  $region12: #{tpu_custom_call.1} parent=0 // pred_region
    _
  $region13: #{tpu_custom_call.1} parent=0 // pred_fallthru
    _
  // Predicated region
  $region14: #{tpu_custom_call.1} parent=0 // pred_check
    _
  $region15: #{tpu_custom_call.1} parent=0 // pred_check_branch
    %22 = sbr.rel (0) target = $region17
  $region16: #{tpu_custom_call.1} parent=0 // pred_region
    _
  $region17: #{tpu_custom_call.1} parent=0 // pred_fallthru
    _
  // Predicated region
  $region18: #{tpu_custom_call.1} parent=0 // pred_check
    _
  $region19: #{tpu_custom_call.1} parent=0 // pred_check_branch
    %24 = sbr.rel (0) target = $region21
  $region20: #{tpu_custom_call.1} parent=0 // pred_region
    _
  $region21: #{tpu_custom_call.1} parent=0 // pred_fallthru
    _
  // Predicated region
  $region22: #{tpu_custom_call.1} parent=0 // pred_check
    _
  $region23: #{tpu_custom_call.1} parent=0 // pred_check_branch
    %26 = sbr.rel (0) target = $region25
  $region24: #{tpu_custom_call.1} parent=0 // pred_region
    _
  $region25: #{tpu_custom_call.1} parent=0 // pred_fallthru
    _
  // Predicated region
  $region26: #{tpu_custom_call.1} parent=0 // pred_check
    _
  $region27: #{tpu_custom_call.1} parent=0 // pred_check_branch
    %28 = sbr.rel (0) target = $region29
  $region28: #{tpu_custom_call.1} parent=0 // pred_region
    _
  $region29: #{tpu_custom_call.1} parent=0 // pred_fallthru
    _
  // Predicated region
  $region30: #{tpu_custom_call.1} parent=0 // pred_check
    _
  $region31: #{tpu_custom_call.1} parent=0 // pred_check_branch
    %30 = sbr.rel (0) target = $region33
  $region32: #{tpu_custom_call.1} parent=0 // pred_region
    _
  $region33: #{tpu_custom_call.1} parent=0 // pred_fallthru
    _
  // Predicated region
  $region34: #{tpu_custom_call.1} parent=0 // pred_check
    _
  $region35: #{tpu_custom_call.1} parent=0 // pred_check_branch
    %32 = sbr.rel (0) target = $region37
  $region36: #{tpu_custom_call.1} parent=0 // pred_region
    _
  $region37: #{tpu_custom_call.1} parent=0 // pred_fallthru
    _
  // Predicated region
  $region38: #{tpu_custom_call.1} parent=0 // pred_check
    _
  $region39: #{tpu_custom_call.1} parent=0 // pred_check_branch
    %34 = sbr.rel (0) target = $region41
  $region40: #{tpu_custom_call.1} parent=0 // pred_region
    _
  $region41: #{tpu_custom_call.1} parent=0 // pred_fallthru
    _
  %v36 = vld [vmem:[%s0] sm:$0xf]
  %v37 = vld [vmem:[%s0 + $0x4] sm:$0xf]
  %v38 = vld [vmem:[%s0 + $0x8] sm:$0xf]
  %v39 = vld [vmem:[%s0 + $0xc] sm:$0xf]
  %v40 = vld [vmem:[%s0 + $0x10] sm:$0xf]
  %v41 = vld [vmem:[%s0 + $0x14] sm:$0xf]
  %v42 = vld [vmem:[%s0 + $0x18] sm:$0xf]
  %v43 = vld [vmem:[%s0 + $0x1c] sm:$0xf]
  %v44 = vld [vmem:[%s1] sm:$0xff]
  %v45 = vld [vmem:[%s1 + $0x8] sm:$0xff]
  %v46 = vld [vmem:[%s3] sm:$0x3]
  %v48 = vlaneseq
  %v49 = vshrl.u32 %v48, 7
  %v50 = vsub.s32 0, %v49
  %v51 = vrot.slane %v46, %v50
  %v52 = vlaneseq
  %v53 = vshrl.u32 %v52, 7
  %v54 = vsub.s32 1, %v53
  %v55 = vrot.slane %v46, %v54
  %v66 = vunpack.c.l.b16 %v36
  %v67 = vunpack.c.l.b16 %v37
  %v68 = vunpack.c.l.b16 %v38
  %v69 = vunpack.c.l.b16 %v39
  %v70 = vunpack.c.l.b16 %v40
  %v71 = vunpack.c.l.b16 %v41
  %v72 = vunpack.c.l.b16 %v42
  %v73 = vunpack.c.l.b16 %v43
  %v74 = vpack.c.b16 %v67, %v66
  %v75 = vpack.c.b16 %v69, %v68
  %v76 = vpack.c.b16 %v71, %v70
  %v77 = vpack.c.b16 %v73, %v72
  %v80 = vunpack.c.l.b16 %v44
  %v81 = vunpack.c.h.b16 %v44
  %v82 = vunpack.c.l.b16 %v45
  %v83 = vunpack.c.h.b16 %v45
  %v84 = vpack.c.b16 %v82, %v80
  %v85 = vpack.c.b16 %v83, %v81
  %vm88 = vcmask 130048
  %v90 = vsel %vm88, %v74, 0
  %v93 = vsel %vm88, %v75, 0
  %v96 = vsel %vm88, %v76, 0
  %v99 = vsel %vm88, %v77, 0
  %101 = vmatprep.subr.bf16.mxu0 0
  %102 = vmatpush1.bf16.msra.mxu0 0
  %103 = vmatprep.subr.bf16.mxu0 0
  %104 = vmatpush1.bf16.msra.mxu0 0
  %105 = vmatprep.subr.bf16.mxu0 0
  %106 = vmatpush1.bf16.msra.mxu0 0
  %107 = vmatprep.subr.bf16.mxu0 0
  %108 = vmatpush1.bf16.msra.mxu0 0
  %109 = vmatprep.subr.bf16.mxu0 0
  %110 = vmatpush1.bf16.msra.mxu0 0
  %111 = vmatprep.subr.bf16.mxu0 0
  %112 = vmatpush1.bf16.msra.mxu0 0
  %113 = vmatprep.subr.bf16.mxu0 0
  %114 = vmatpush1.bf16.msra.mxu0 0
  %115 = vmatprep.subr.bf16.mxu0 %v85
  %116 = vmatpush1.bf16.msra.mxu0 %v84
  %117 = vmatprep.subr.bf16.mxu0 0
  %118 = vmatpush2.bf16.msra.mxu0 0
  %119 = vmatprep.subr.bf16.mxu0 0
  %120 = vmatpush2.bf16.msra.mxu0 0
  %121 = vmatprep.subr.bf16.mxu0 0
  %122 = vmatpush2.bf16.msra.mxu0 0
  %123 = vmatprep.subr.bf16.mxu0 0
  %124 = vmatpush2.bf16.msra.mxu0 0
  %125 = vmatprep.subr.bf16.mxu0 0
  %126 = vmatpush2.bf16.msra.mxu0 0
  %127 = vmatprep.subr.bf16.mxu0 0
  %128 = vmatpush2.bf16.msra.mxu0 0
  %129 = vmatprep.subr.bf16.mxu0 0
  %130 = vmatpush2.bf16.msra.mxu0 0
  %131 = vmatprep.subr.bf16.mxu0 0
  %132 = vmatpush2.bf16.msra.mxu0 0
  %133 = vmatprep.mubr.bf16.mxu0 0
  %134 = vmatmul.mubr.bf16.gmra.mxu0 %v90
  %v135 = vpop.f32.mrf.mxu0
  %v136 = vadd.f32 %v51, %v135
  %v137 = vpop.f32.mrf.mxu0
  %v138 = vadd.f32 %v55, %v137
  %v139 = vpop.f32.mrf.mxu0
  %v140 = vadd.f32 %v51, %v139
  %v141 = vpop.f32.mrf.mxu0
  %v142 = vadd.f32 %v55, %v141
  %143 = vmatprep.mubr.bf16.mxu0 0
  %144 = vmatmul.mubr.bf16.gmra.mxu0 %v93
  %v145 = vpop.f32.mrf.mxu0
  %v146 = vadd.f32 %v51, %v145
  %v147 = vpop.f32.mrf.mxu0
  %v148 = vadd.f32 %v55, %v147
  %v149 = vpop.f32.mrf.mxu0
  %v150 = vadd.f32 %v51, %v149
  %v151 = vpop.f32.mrf.mxu0
  %v152 = vadd.f32 %v55, %v151
  %153 = vmatprep.mubr.bf16.mxu0 0
  %154 = vmatmul.mubr.bf16.gmra.mxu0 %v96
  %v155 = vpop.f32.mrf.mxu0
  %v156 = vadd.f32 %v51, %v155
  %v157 = vpop.f32.mrf.mxu0
  %v158 = vadd.f32 %v55, %v157
  %v159 = vpop.f32.mrf.mxu0
  %v160 = vadd.f32 %v51, %v159
  %v161 = vpop.f32.mrf.mxu0
  %v162 = vadd.f32 %v55, %v161
  %163 = vmatprep.mubr.bf16.mxu0 0
  %164 = vmatmul.mubr.bf16.gmra.mxu0 %v99
  %v165 = vpop.f32.mrf.mxu0
  %v166 = vadd.f32 %v51, %v165
  %v167 = vpop.f32.mrf.mxu0
  %v168 = vadd.f32 %v55, %v167
  %v169 = vpop.f32.mrf.mxu0
  %v170 = vadd.f32 %v51, %v169
  %v171 = vpop.f32.mrf.mxu0
  %v172 = vadd.f32 %v55, %v171
  %173 = vdwg.mxu0
  %174 = vst [vmem:[#allocation2] sm:$0xff] %v136
  %175 = vst [vmem:[#allocation2 + $0x8] sm:$0xff] %v138
  %176 = vst [vmem:[#allocation2 + $0x10] sm:$0xff] %v140
  %177 = vst [vmem:[#allocation2 + $0x18] sm:$0xff] %v142
  %178 = vst [vmem:[#allocation2 + $0x20] sm:$0xff] %v146
  %179 = vst [vmem:[#allocation2 + $0x28] sm:$0xff] %v148
  %180 = vst [vmem:[#allocation2 + $0x30] sm:$0xff] %v150
  %181 = vst [vmem:[#allocation2 + $0x38] sm:$0xff] %v152
  %182 = vst [vmem:[#allocation2 + $0x40] sm:$0xff] %v156
  %183 = vst [vmem:[#allocation2 + $0x48] sm:$0xff] %v158
  %184 = vst [vmem:[#allocation2 + $0x50] sm:$0xff] %v160
  %185 = vst [vmem:[#allocation2 + $0x58] sm:$0xff] %v162
  %186 = vst [vmem:[#allocation2 + $0x60] sm:$0xff] %v166
  %187 = vst [vmem:[#allocation2 + $0x68] sm:$0xff] %v168
  %188 = vst [vmem:[#allocation2 + $0x70] sm:$0xff] %v170
  %189 = vst [vmem:[#allocation2 + $0x78] sm:$0xff] %v172
  %v190 = vld [vmem:[#allocation2] sm:$0xff]
  %v191 = vld [vmem:[#allocation2 + $0x8] sm:$0xff]
  %v192 = vld [vmem:[%s2] sm:$0xff]
  %v193 = vld [vmem:[%s2 + $0x8] sm:$0xff]
  %v194 = vld [vmem:[%s2 + $0x10] sm:$0xff]
  %v195 = vld [vmem:[%s2 + $0x18] sm:$0xff]
  %v196 = vld [vmem:[%s2 + $0x20] sm:$0xff]
  %v197 = vld [vmem:[%s2 + $0x28] sm:$0xff]
  %v198 = vld [vmem:[%s2 + $0x30] sm:$0xff]
  %v199 = vld [vmem:[%s2 + $0x38] sm:$0xff]
  %v208 = vunpack.c.l.b16 %v192
  %v209 = vunpack.c.h.b16 %v192
  %v210 = vunpack.c.l.b16 %v193
  %v211 = vunpack.c.h.b16 %v193
  %v212 = vunpack.c.l.b16 %v194
  %v213 = vunpack.c.h.b16 %v194
  %v214 = vunpack.c.l.b16 %v195
  %v215 = vunpack.c.h.b16 %v195
  %v216 = vunpack.c.l.b16 %v196
  %v217 = vunpack.c.h.b16 %v196
  %v218 = vunpack.c.l.b16 %v197
  %v219 = vunpack.c.h.b16 %v197
  %v220 = vunpack.c.l.b16 %v198
  %v221 = vunpack.c.h.b16 %v198
  %v222 = vunpack.c.l.b16 %v199
  %v223 = vunpack.c.h.b16 %v199
  %v224 = vpack.c.b16 %v210, %v208
  %v225 = vpack.c.b16 %v211, %v209
  %v226 = vpack.c.b16 %v214, %v212
  %v227 = vpack.c.b16 %v215, %v213
  %v228 = vpack.c.b16 %v218, %v216
  %v229 = vpack.c.b16 %v219, %v217
  %v230 = vpack.c.b16 %v222, %v220
  %v231 = vpack.c.b16 %v223, %v221
  %vm240 = vcmask 523264
  %v242 = vsel %vm240, 0, 0
  %244 = vmatprep.subr.bf16.mxu0 0
  %245 = vmatpush1.bf16.msra.mxu0 0
  %246 = vmatprep.subr.bf16.mxu0 0
  %247 = vmatpush1.bf16.msra.mxu0 0
  %248 = vmatprep.subr.bf16.mxu0 0
  %249 = vmatpush1.bf16.msra.mxu0 0
  %250 = vmatprep.subr.bf16.mxu0 0
  %251 = vmatpush1.bf16.msra.mxu0 0
  %252 = vmatprep.subr.bf16.mxu0 %v231
  %253 = vmatpush1.bf16.msra.mxu0 %v230
  %254 = vmatprep.subr.bf16.mxu0 %v229
  %255 = vmatpush1.bf16.msra.mxu0 %v228
  %256 = vmatprep.subr.bf16.mxu0 %v227
  %257 = vmatpush1.bf16.msra.mxu0 %v226
  %258 = vmatprep.subr.bf16.mxu0 %v225
  %259 = vmatpush1.bf16.msra.mxu0 %v224
  %260 = vmatprep.subr.bf16.mxu0 0
  %261 = vmatpush2.bf16.msra.mxu0 0
  %262 = vmatprep.subr.bf16.mxu0 0
  %263 = vmatpush2.bf16.msra.mxu0 0
  %264 = vmatprep.subr.bf16.mxu0 0
  %265 = vmatpush2.bf16.msra.mxu0 0
  %266 = vmatprep.subr.bf16.mxu0 0
  %267 = vmatpush2.bf16.msra.mxu0 0
  %268 = vmatprep.subr.bf16.mxu0 0
  %269 = vmatpush2.bf16.msra.mxu0 0
  %270 = vmatprep.subr.bf16.mxu0 0
  %271 = vmatpush2.bf16.msra.mxu0 0
  %272 = vmatprep.subr.bf16.mxu0 0
  %273 = vmatpush2.bf16.msra.mxu0 0
  %274 = vmatprep.subr.bf16.mxu0 0
  %275 = vmatpush2.bf16.msra.mxu0 0
  %276 = vmatprep.mubr.bf16.mxu0 0
  %277 = vmatmul.mubr.bf16.gmra.mxu0 %v242
  %v278 = vpop.f32.mrf.mxu0
  %v279 = vadd.f32 0.0, %v278
  %v280 = vpop.f32.mrf.mxu0
  %v281 = vadd.f32 0.0, %v280
  %v282 = vpop.f32.mrf.mxu0
  %v283 = vpop.f32.mrf.mxu0
  %284 = vdwg.mxu0
  %v285 = vadd.f32 %v190, %v279
  %v286 = vadd.f32 %v191, %v281
  %v287 = vxor.u32 %v285, 2147483648
  %v288 = vxor.u32 %v286, 2147483648
  %v289 = vmul.f32 %v287, 1.442695
  %v290 = vpow.pop %v289
  %v291 = vmul.f32 %v288, 1.442695
  %v292 = vpow.pop %v291
  %v293 = vadd.f32 %v290, 1.0
  %v294 = vadd.f32 %v292, 1.0
  %v295 = vrcp.pop %v293
  %v296 = vmul.f32 1.0, %v295
  %v297 = vrcp.pop %v294
  %v298 = vmul.f32 1.0, %v297
  %v299 = vtanh.pop %v286
  %v300 = vmul.f32 %v296, 0.0
  %302 = vrot.lane.b32.xlu0 %v299, 64
  %v303 = vpop.permute.xlu0 %302
  %v305 = vmul.f32 %v296, %v303
  %307 = vrot.lane.b32.xlu0 %v305, 64
  %v308 = vpop.permute.xlu0 %307
  %v310 = vadd.f32 %v300, %v308
  %v311 = vtanh.pop %v310
  %313 = vrot.lane.b32.xlu0 %v311, 64
  %v314 = vpop.permute.xlu0 %313
  %v316 = vmul.f32 %v298, %v314
  %317 = vst.msk [vmem:[#allocation3] sm:$0xff] %vm240, %v316
  %v318 = vld [vmem:[#allocation2 + $0x10] sm:$0xff]
  %v319 = vld [vmem:[#allocation2 + $0x18] sm:$0xff]
  %v320 = vpack.c.bf16 %v316, %v316
  %v321 = vld [vmem:[%s2] sm:$0xff]
  %v322 = vld [vmem:[%s2 + $0x8] sm:$0xff]
  %v323 = vld [vmem:[%s2 + $0x10] sm:$0xff]
  %v324 = vld [vmem:[%s2 + $0x18] sm:$0xff]
  %v325 = vld [vmem:[%s2 + $0x20] sm:$0xff]
  %v326 = vld [vmem:[%s2 + $0x28] sm:$0xff]
  %v327 = vld [vmem:[%s2 + $0x30] sm:$0xff]
  %v328 = vld [vmem:[%s2 + $0x38] sm:$0xff]
  %v337 = vunpack.c.l.b16 %v321
  %v338 = vunpack.c.h.b16 %v321
  %v339 = vunpack.c.l.b16 %v322
  %v340 = vunpack.c.h.b16 %v322
  %v341 = vunpack.c.l.b16 %v323
  %v342 = vunpack.c.h.b16 %v323
  %v343 = vunpack.c.l.b16 %v324
  %v344 = vunpack.c.h.b16 %v324
  %v345 = vunpack.c.l.b16 %v325
  %v346 = vunpack.c.h.b16 %v325
  %v347 = vunpack.c.l.b16 %v326
  %v348 = vunpack.c.h.b16 %v326
  %v349 = vunpack.c.l.b16 %v327
  %v350 = vunpack.c.h.b16 %v327
  %v351 = vunpack.c.l.b16 %v328
  %v352 = vunpack.c.h.b16 %v328
  %v353 = vpack.c.b16 %v339, %v337
  %v354 = vpack.c.b16 %v340, %v338
  %v355 = vpack.c.b16 %v343, %v341
  %v356 = vpack.c.b16 %v344, %v342
  %v357 = vpack.c.b16 %v347, %v345
  %v358 = vpack.c.b16 %v348, %v346
  %v359 = vpack.c.b16 %v351, %v349
  %v360 = vpack.c.b16 %v352, %v350
  %v370 = vsel %vm240, %v320, 0
  %372 = vmatprep.subr.bf16.mxu0 0
  %373 = vmatpush1.bf16.msra.mxu0 0
  %374 = vmatprep.subr.bf16.mxu0 0
  %375 = vmatpush1.bf16.msra.mxu0 0
  %376 = vmatprep.subr.bf16.mxu0 0
  %377 = vmatpush1.bf16.msra.mxu0 0
  %378 = vmatprep.subr.bf16.mxu0 0
  %379 = vmatpush1.bf16.msra.mxu0 0
  %380 = vmatprep.subr.bf16.mxu0 %v360
  %381 = vmatpush1.bf16.msra.mxu0 %v359
  %382 = vmatprep.subr.bf16.mxu0 %v358
  %383 = vmatpush1.bf16.msra.mxu0 %v357
  %384 = vmatprep.subr.bf16.mxu0 %v356
  %385 = vmatpush1.bf16.msra.mxu0 %v355
  %386 = vmatprep.subr.bf16.mxu0 %v354
  %387 = vmatpush1.bf16.msra.mxu0 %v353
  %388 = vmatprep.subr.bf16.mxu0 0
  %389 = vmatpush2.bf16.msra.mxu0 0
  %390 = vmatprep.subr.bf16.mxu0 0
  %391 = vmatpush2.bf16.msra.mxu0 0
  %392 = vmatprep.subr.bf16.mxu0 0
  %393 = vmatpush2.bf16.msra.mxu0 0
  %394 = vmatprep.subr.bf16.mxu0 0
  %395 = vmatpush2.bf16.msra.mxu0 0
  %396 = vmatprep.subr.bf16.mxu0 0
  %397 = vmatpush2.bf16.msra.mxu0 0
  %398 = vmatprep.subr.bf16.mxu0 0
  %399 = vmatpush2.bf16.msra.mxu0 0
  %400 = vmatprep.subr.bf16.mxu0 0
  %401 = vmatpush2.bf16.msra.mxu0 0
  %402 = vmatprep.subr.bf16.mxu0 0
  %403 = vmatpush2.bf16.msra.mxu0 0
  %404 = vmatprep.mubr.bf16.mxu0 0
  %405 = vmatmul.mubr.bf16.gmra.mxu0 %v370
  %v406 = vpop.f32.mrf.mxu0
  %v407 = vadd.f32 0.0, %v406
  %v408 = vpop.f32.mrf.mxu0
  %v409 = vadd.f32 0.0, %v408
  %v410 = vpop.f32.mrf.mxu0
  %v411 = vpop.f32.mrf.mxu0
  %412 = vdwg.mxu0
  %v413 = vadd.f32 %v318, %v407
  %v414 = vadd.f32 %v319, %v409
  %v415 = vxor.u32 %v413, 2147483648
  %v416 = vxor.u32 %v414, 2147483648
  %v417 = vmul.f32 %v415, 1.442695
  %v418 = vpow.pop %v417
  %v419 = vmul.f32 %v416, 1.442695
  %v420 = vpow.pop %v419
  %v421 = vadd.f32 %v418, 1.0
  %v422 = vadd.f32 %v420, 1.0
  %v423 = vrcp.pop %v421
  %v424 = vmul.f32 1.0, %v423
  %v425 = vrcp.pop %v422
  %v426 = vmul.f32 1.0, %v425
  %v427 = vtanh.pop %v414
  %v428 = vmul.f32 %v424, %v310
  %430 = vrot.lane.b32.xlu0 %v427, 64
  %v431 = vpop.permute.xlu0 %430
  %v433 = vmul.f32 %v424, %v431
  %435 = vrot.lane.b32.xlu0 %v433, 64
  %v436 = vpop.permute.xlu0 %435
  %v438 = vadd.f32 %v428, %v436
  %v439 = vtanh.pop %v438
  %441 = vrot.lane.b32.xlu0 %v439, 64
  %v442 = vpop.permute.xlu0 %441
  %v444 = vmul.f32 %v426, %v442
  %445 = vst.msk [vmem:[#allocation3 + $0x8] sm:$0xff] %vm240, %v444
  %v446 = vld [vmem:[#allocation2 + $0x20] sm:$0xff]
  %v447 = vld [vmem:[#allocation2 + $0x28] sm:$0xff]
  %v448 = vpack.c.bf16 %v444, %v444
  %v449 = vld [vmem:[%s2] sm:$0xff]
  %v450 = vld [vmem:[%s2 + $0x8] sm:$0xff]
  %v451 = vld [vmem:[%s2 + $0x10] sm:$0xff]
  %v452 = vld [vmem:[%s2 + $0x18] sm:$0xff]
  %v453 = vld [vmem:[%s2 + $0x20] sm:$0xff]
  %v454 = vld [vmem:[%s2 + $0x28] sm:$0xff]
  %v455 = vld [vmem:[%s2 + $0x30] sm:$0xff]
  %v456 = vld [vmem:[%s2 + $0x38] sm:$0xff]
  %v465 = vunpack.c.l.b16 %v449
  %v466 = vunpack.c.h.b16 %v449
  %v467 = vunpack.c.l.b16 %v450
  %v468 = vunpack.c.h.b16 %v450
  %v469 = vunpack.c.l.b16 %v451
  %v470 = vunpack.c.h.b16 %v451
  %v471 = vunpack.c.l.b16 %v452
  %v472 = vunpack.c.h.b16 %v452
  %v473 = vunpack.c.l.b16 %v453
  %v474 = vunpack.c.h.b16 %v453
  %v475 = vunpack.c.l.b16 %v454
  %v476 = vunpack.c.h.b16 %v454
  %v477 = vunpack.c.l.b16 %v455
  %v478 = vunpack.c.h.b16 %v455
  %v479 = vunpack.c.l.b16 %v456
  %v480 = vunpack.c.h.b16 %v456
  %v481 = vpack.c.b16 %v467, %v465
  %v482 = vpack.c.b16 %v468, %v466
  %v483 = vpack.c.b16 %v471, %v469
  %v484 = vpack.c.b16 %v472, %v470
  %v485 = vpack.c.b16 %v475, %v473
  %v486 = vpack.c.b16 %v476, %v474
  %v487 = vpack.c.b16 %v479, %v477
  %v488 = vpack.c.b16 %v480, %v478
  %v498 = vsel %vm240, %v448, 0
  %500 = vmatprep.subr.bf16.mxu0 0
  %501 = vmatpush1.bf16.msra.mxu0 0
  %502 = vmatprep.subr.bf16.mxu0 0
  %503 = vmatpush1.bf16.msra.mxu0 0
  %504 = vmatprep.subr.bf16.mxu0 0
  %505 = vmatpush1.bf16.msra.mxu0 0
  %506 = vmatprep.subr.bf16.mxu0 0
  %507 = vmatpush1.bf16.msra.mxu0 0
  %508 = vmatprep.subr.bf16.mxu0 %v488
  %509 = vmatpush1.bf16.msra.mxu0 %v487
  %510 = vmatprep.subr.bf16.mxu0 %v486
  %511 = vmatpush1.bf16.msra.mxu0 %v485
  %512 = vmatprep.subr.bf16.mxu0 %v484
  %513 = vmatpush1.bf16.msra.mxu0 %v483
  %514 = vmatprep.subr.bf16.mxu0 %v482
  %515 = vmatpush1.bf16.msra.mxu0 %v481
  %516 = vmatprep.subr.bf16.mxu0 0
  %517 = vmatpush2.bf16.msra.mxu0 0
  %518 = vmatprep.subr.bf16.mxu0 0
  %519 = vmatpush2.bf16.msra.mxu0 0
  %520 = vmatprep.subr.bf16.mxu0 0
  %521 = vmatpush2.bf16.msra.mxu0 0
  %522 = vmatprep.subr.bf16.mxu0 0
  %523 = vmatpush2.bf16.msra.mxu0 0
  %524 = vmatprep.subr.bf16.mxu0 0
  %525 = vmatpush2.bf16.msra.mxu0 0
  %526 = vmatprep.subr.bf16.mxu0 0
  %527 = vmatpush2.bf16.msra.mxu0 0
  %528 = vmatprep.subr.bf16.mxu0 0
  %529 = vmatpush2.bf16.msra.mxu0 0
  %530 = vmatprep.subr.bf16.mxu0 0
  %531 = vmatpush2.bf16.msra.mxu0 0
  %532 = vmatprep.mubr.bf16.mxu0 0
  %533 = vmatmul.mubr.bf16.gmra.mxu0 %v498
  %v534 = vpop.f32.mrf.mxu0
  %v535 = vadd.f32 0.0, %v534
  %v536 = vpop.f32.mrf.mxu0
  %v537 = vadd.f32 0.0, %v536
  %v538 = vpop.f32.mrf.mxu0
  %v539 = vpop.f32.mrf.mxu0
  %540 = vdwg.mxu0
  %v541 = vadd.f32 %v446, %v535
  %v542 = vadd.f32 %v447, %v537
  %v543 = vxor.u32 %v541, 2147483648
  %v544 = vxor.u32 %v542, 2147483648
  %v545 = vmul.f32 %v543, 1.442695
  %v546 = vpow.pop %v545
  %v547 = vmul.f32 %v544, 1.442695
  %v548 = vpow.pop %v547
  %v549 = vadd.f32 %v546, 1.0
  %v550 = vadd.f32 %v548, 1.0
  %v551 = vrcp.pop %v549
  %v552 = vmul.f32 1.0, %v551
  %v553 = vrcp.pop %v550
  %v554 = vmul.f32 1.0, %v553
  %v555 = vtanh.pop %v542
  %v556 = vmul.f32 %v552, %v438
  %558 = vrot.lane.b32.xlu0 %v555, 64
  %v559 = vpop.permute.xlu0 %558
  %v561 = vmul.f32 %v552, %v559
  %563 = vrot.lane.b32.xlu0 %v561, 64
  %v564 = vpop.permute.xlu0 %563
  %v566 = vadd.f32 %v556, %v564
  %v567 = vtanh.pop %v566
  %569 = vrot.lane.b32.xlu0 %v567, 64
  %v570 = vpop.permute.xlu0 %569
  %v572 = vmul.f32 %v554, %v570
  %573 = vst.msk [vmem:[#allocation3 + $0x10] sm:$0xff] %vm240, %v572
  %v574 = vld [vmem:[#allocation2 + $0x30] sm:$0xff]
  %v575 = vld [vmem:[#allocation2 + $0x38] sm:$0xff]
  %v576 = vpack.c.bf16 %v572, %v572
  %v577 = vld [vmem:[%s2] sm:$0xff]
  %v578 = vld [vmem:[%s2 + $0x8] sm:$0xff]
  %v579 = vld [vmem:[%s2 + $0x10] sm:$0xff]
  %v580 = vld [vmem:[%s2 + $0x18] sm:$0xff]
  %v581 = vld [vmem:[%s2 + $0x20] sm:$0xff]
  %v582 = vld [vmem:[%s2 + $0x28] sm:$0xff]
  %v583 = vld [vmem:[%s2 + $0x30] sm:$0xff]
  %v584 = vld [vmem:[%s2 + $0x38] sm:$0xff]
  %v593 = vunpack.c.l.b16 %v577
  %v594 = vunpack.c.h.b16 %v577
  %v595 = vunpack.c.l.b16 %v578
  %v596 = vunpack.c.h.b16 %v578
  %v597 = vunpack.c.l.b16 %v579
  %v598 = vunpack.c.h.b16 %v579
  %v599 = vunpack.c.l.b16 %v580
  %v600 = vunpack.c.h.b16 %v580
  %v601 = vunpack.c.l.b16 %v581
  %v602 = vunpack.c.h.b16 %v581
  %v603 = vunpack.c.l.b16 %v582
  %v604 = vunpack.c.h.b16 %v582
  %v605 = vunpack.c.l.b16 %v583
  %v606 = vunpack.c.h.b16 %v583
  %v607 = vunpack.c.l.b16 %v584
  %v608 = vunpack.c.h.b16 %v584
  %v609 = vpack.c.b16 %v595, %v593
  %v610 = vpack.c.b16 %v596, %v594
  %v611 = vpack.c.b16 %v599, %v597
  %v612 = vpack.c.b16 %v600, %v598
  %v613 = vpack.c.b16 %v603, %v601
  %v614 = vpack.c.b16 %v604, %v602
  %v615 = vpack.c.b16 %v607, %v605
  %v616 = vpack.c.b16 %v608, %v606
  %v626 = vsel %vm240, %v576, 0
  %628 = vmatprep.subr.bf16.mxu0 0
  %629 = vmatpush1.bf16.msra.mxu0 0
  %630 = vmatprep.subr.bf16.mxu0 0
  %631 = vmatpush1.bf16.msra.mxu0 0
  %632 = vmatprep.subr.bf16.mxu0 0
  %633 = vmatpush1.bf16.msra.mxu0 0
  %634 = vmatprep.subr.bf16.mxu0 0
  %635 = vmatpush1.bf16.msra.mxu0 0
  %636 = vmatprep.subr.bf16.mxu0 %v616
  %637 = vmatpush1.bf16.msra.mxu0 %v615
  %638 = vmatprep.subr.bf16.mxu0 %v614
  %639 = vmatpush1.bf16.msra.mxu0 %v613
  %640 = vmatprep.subr.bf16.mxu0 %v612
  %641 = vmatpush1.bf16.msra.mxu0 %v611
  %642 = vmatprep.subr.bf16.mxu0 %v610
  %643 = vmatpush1.bf16.msra.mxu0 %v609
  %644 = vmatprep.subr.bf16.mxu0 0
  %645 = vmatpush2.bf16.msra.mxu0 0
  %646 = vmatprep.subr.bf16.mxu0 0
  %647 = vmatpush2.bf16.msra.mxu0 0
  %648 = vmatprep.subr.bf16.mxu0 0
  %649 = vmatpush2.bf16.msra.mxu0 0
  %650 = vmatprep.subr.bf16.mxu0 0
  %651 = vmatpush2.bf16.msra.mxu0 0
  %652 = vmatprep.subr.bf16.mxu0 0
  %653 = vmatpush2.bf16.msra.mxu0 0
  %654 = vmatprep.subr.bf16.mxu0 0
  %655 = vmatpush2.bf16.msra.mxu0 0
  %656 = vmatprep.subr.bf16.mxu0 0
  %657 = vmatpush2.bf16.msra.mxu0 0
  %658 = vmatprep.subr.bf16.mxu0 0
  %659 = vmatpush2.bf16.msra.mxu0 0
  %660 = vmatprep.mubr.bf16.mxu0 0
  %661 = vmatmul.mubr.bf16.gmra.mxu0 %v626
  %v662 = vpop.f32.mrf.mxu0
  %v663 = vadd.f32 0.0, %v662
  %v664 = vpop.f32.mrf.mxu0
  %v665 = vadd.f32 0.0, %v664
  %v666 = vpop.f32.mrf.mxu0
  %v667 = vpop.f32.mrf.mxu0
  %668 = vdwg.mxu0
  %v669 = vadd.f32 %v574, %v663
  %v670 = vadd.f32 %v575, %v665
  %v671 = vxor.u32 %v669, 2147483648
  %v672 = vxor.u32 %v670, 2147483648
  %v673 = vmul.f32 %v671, 1.442695
  %v674 = vpow.pop %v673
  %v675 = vmul.f32 %v672, 1.442695
  %v676 = vpow.pop %v675
  %v677 = vadd.f32 %v674, 1.0
  %v678 = vadd.f32 %v676, 1.0
  %v679 = vrcp.pop %v677
  %v680 = vmul.f32 1.0, %v679
  %v681 = vrcp.pop %v678
  %v682 = vmul.f32 1.0, %v681
  %v683 = vtanh.pop %v670
  %v684 = vmul.f32 %v680, %v566
  %686 = vrot.lane.b32.xlu0 %v683, 64
  %v687 = vpop.permute.xlu0 %686
  %v689 = vmul.f32 %v680, %v687
  %691 = vrot.lane.b32.xlu0 %v689, 64
  %v692 = vpop.permute.xlu0 %691
  %v694 = vadd.f32 %v684, %v692
  %v695 = vtanh.pop %v694
  %697 = vrot.lane.b32.xlu0 %v695, 64
  %v698 = vpop.permute.xlu0 %697
  %v700 = vmul.f32 %v682, %v698
  %701 = vst.msk [vmem:[#allocation3 + $0x18] sm:$0xff] %vm240, %v700
  %v702 = vld [vmem:[#allocation2 + $0x40] sm:$0xff]
  %v703 = vld [vmem:[#allocation2 + $0x48] sm:$0xff]
  %v704 = vpack.c.bf16 %v700, %v700
  %v705 = vld [vmem:[%s2] sm:$0xff]
  %v706 = vld [vmem:[%s2 + $0x8] sm:$0xff]
  %v707 = vld [vmem:[%s2 + $0x10] sm:$0xff]
  %v708 = vld [vmem:[%s2 + $0x18] sm:$0xff]
  %v709 = vld [vmem:[%s2 + $0x20] sm:$0xff]
  %v710 = vld [vmem:[%s2 + $0x28] sm:$0xff]
  %v711 = vld [vmem:[%s2 + $0x30] sm:$0xff]
  %v712 = vld [vmem:[%s2 + $0x38] sm:$0xff]
  %v721 = vunpack.c.l.b16 %v705
  %v722 = vunpack.c.h.b16 %v705
  %v723 = vunpack.c.l.b16 %v706
  %v724 = vunpack.c.h.b16 %v706
  %v725 = vunpack.c.l.b16 %v707
  %v726 = vunpack.c.h.b16 %v707
  %v727 = vunpack.c.l.b16 %v708
  %v728 = vunpack.c.h.b16 %v708
  %v729 = vunpack.c.l.b16 %v709
  %v730 = vunpack.c.h.b16 %v709
  %v731 = vunpack.c.l.b16 %v710
  %v732 = vunpack.c.h.b16 %v710
  %v733 = vunpack.c.l.b16 %v711
  %v734 = vunpack.c.h.b16 %v711
  %v735 = vunpack.c.l.b16 %v712
  %v736 = vunpack.c.h.b16 %v712
  %v737 = vpack.c.b16 %v723, %v721
  %v738 = vpack.c.b16 %v724, %v722
  %v739 = vpack.c.b16 %v727, %v725
  %v740 = vpack.c.b16 %v728, %v726
  %v741 = vpack.c.b16 %v731, %v729
  %v742 = vpack.c.b16 %v732, %v730
  %v743 = vpack.c.b16 %v735, %v733
  %v744 = vpack.c.b16 %v736, %v734
  %v754 = vsel %vm240, %v704, 0
  %756 = vmatprep.subr.bf16.mxu0 0
  %757 = vmatpush1.bf16.msra.mxu0 0
  %758 = vmatprep.subr.bf16.mxu0 0
  %759 = vmatpush1.bf16.msra.mxu0 0
  %760 = vmatprep.subr.bf16.mxu0 0
  %761 = vmatpush1.bf16.msra.mxu0 0
  %762 = vmatprep.subr.bf16.mxu0 0
  %763 = vmatpush1.bf16.msra.mxu0 0
  %764 = vmatprep.subr.bf16.mxu0 %v744
  %765 = vmatpush1.bf16.msra.mxu0 %v743
  %766 = vmatprep.subr.bf16.mxu0 %v742
  %767 = vmatpush1.bf16.msra.mxu0 %v741
  %768 = vmatprep.subr.bf16.mxu0 %v740
  %769 = vmatpush1.bf16.msra.mxu0 %v739
  %770 = vmatprep.subr.bf16.mxu0 %v738
  %771 = vmatpush1.bf16.msra.mxu0 %v737
  %772 = vmatprep.subr.bf16.mxu0 0
  %773 = vmatpush2.bf16.msra.mxu0 0
  %774 = vmatprep.subr.bf16.mxu0 0
  %775 = vmatpush2.bf16.msra.mxu0 0
  %776 = vmatprep.subr.bf16.mxu0 0
  %777 = vmatpush2.bf16.msra.mxu0 0
  %778 = vmatprep.subr.bf16.mxu0 0
  %779 = vmatpush2.bf16.msra.mxu0 0
  %780 = vmatprep.subr.bf16.mxu0 0
  %781 = vmatpush2.bf16.msra.mxu0 0
  %782 = vmatprep.subr.bf16.mxu0 0
  %783 = vmatpush2.bf16.msra.mxu0 0
  %784 = vmatprep.subr.bf16.mxu0 0
  %785 = vmatpush2.bf16.msra.mxu0 0
  %786 = vmatprep.subr.bf16.mxu0 0
  %787 = vmatpush2.bf16.msra.mxu0 0
  %788 = vmatprep.mubr.bf16.mxu0 0
  %789 = vmatmul.mubr.bf16.gmra.mxu0 %v754
  %v790 = vpop.f32.mrf.mxu0
  %v791 = vadd.f32 0.0, %v790
  %v792 = vpop.f32.mrf.mxu0
  %v793 = vadd.f32 0.0, %v792
  %v794 = vpop.f32.mrf.mxu0
  %v795 = vpop.f32.mrf.mxu0
  %796 = vdwg.mxu0
  %v797 = vadd.f32 %v702, %v791
  %v798 = vadd.f32 %v703, %v793
  %v799 = vxor.u32 %v797, 2147483648
  %v800 = vxor.u32 %v798, 2147483648
  %v801 = vmul.f32 %v799, 1.442695
  %v802 = vpow.pop %v801
  %v803 = vmul.f32 %v800, 1.442695
  %v804 = vpow.pop %v803
  %v805 = vadd.f32 %v802, 1.0
  %v806 = vadd.f32 %v804, 1.0
  %v807 = vrcp.pop %v805
  %v808 = vmul.f32 1.0, %v807
  %v809 = vrcp.pop %v806
  %v810 = vmul.f32 1.0, %v809
  %v811 = vtanh.pop %v798
  %v812 = vmul.f32 %v808, %v694
  %814 = vrot.lane.b32.xlu0 %v811, 64
  %v815 = vpop.permute.xlu0 %814
  %v817 = vmul.f32 %v808, %v815
  %819 = vrot.lane.b32.xlu0 %v817, 64
  %v820 = vpop.permute.xlu0 %819
  %v822 = vadd.f32 %v812, %v820
  %v823 = vtanh.pop %v822
  %825 = vrot.lane.b32.xlu0 %v823, 64
  %v826 = vpop.permute.xlu0 %825
  %v828 = vmul.f32 %v810, %v826
  %829 = vst.msk [vmem:[#allocation3 + $0x20] sm:$0xff] %vm240, %v828
  %v830 = vld [vmem:[#allocation2 + $0x50] sm:$0xff]
  %v831 = vld [vmem:[#allocation2 + $0x58] sm:$0xff]
  %v832 = vpack.c.bf16 %v828, %v828
  %v833 = vld [vmem:[%s2] sm:$0xff]
  %v834 = vld [vmem:[%s2 + $0x8] sm:$0xff]
  %v835 = vld [vmem:[%s2 + $0x10] sm:$0xff]
  %v836 = vld [vmem:[%s2 + $0x18] sm:$0xff]
  %v837 = vld [vmem:[%s2 + $0x20] sm:$0xff]
  %v838 = vld [vmem:[%s2 + $0x28] sm:$0xff]
  %v839 = vld [vmem:[%s2 + $0x30] sm:$0xff]
  %v840 = vld [vmem:[%s2 + $0x38] sm:$0xff]
  %v849 = vunpack.c.l.b16 %v833
  %v850 = vunpack.c.h.b16 %v833
  %v851 = vunpack.c.l.b16 %v834
  %v852 = vunpack.c.h.b16 %v834
  %v853 = vunpack.c.l.b16 %v835
  %v854 = vunpack.c.h.b16 %v835
  %v855 = vunpack.c.l.b16 %v836
  %v856 = vunpack.c.h.b16 %v836
  %v857 = vunpack.c.l.b16 %v837
  %v858 = vunpack.c.h.b16 %v837
  %v859 = vunpack.c.l.b16 %v838
  %v860 = vunpack.c.h.b16 %v838
  %v861 = vunpack.c.l.b16 %v839
  %v862 = vunpack.c.h.b16 %v839
  %v863 = vunpack.c.l.b16 %v840
  %v864 = vunpack.c.h.b16 %v840
  %v865 = vpack.c.b16 %v851, %v849
  %v866 = vpack.c.b16 %v852, %v850
  %v867 = vpack.c.b16 %v855, %v853
  %v868 = vpack.c.b16 %v856, %v854
  %v869 = vpack.c.b16 %v859, %v857
  %v870 = vpack.c.b16 %v860, %v858
  %v871 = vpack.c.b16 %v863, %v861
  %v872 = vpack.c.b16 %v864, %v862
  %v882 = vsel %vm240, %v832, 0
  %884 = vmatprep.subr.bf16.mxu0 0
  %885 = vmatpush1.bf16.msra.mxu0 0
  %886 = vmatprep.subr.bf16.mxu0 0
  %887 = vmatpush1.bf16.msra.mxu0 0
  %888 = vmatprep.subr.bf16.mxu0 0
  %889 = vmatpush1.bf16.msra.mxu0 0
  %890 = vmatprep.subr.bf16.mxu0 0
  %891 = vmatpush1.bf16.msra.mxu0 0
  %892 = vmatprep.subr.bf16.mxu0 %v872
  %893 = vmatpush1.bf16.msra.mxu0 %v871
  %894 = vmatprep.subr.bf16.mxu0 %v870
  %895 = vmatpush1.bf16.msra.mxu0 %v869
  %896 = vmatprep.subr.bf16.mxu0 %v868
  %897 = vmatpush1.bf16.msra.mxu0 %v867
  %898 = vmatprep.subr.bf16.mxu0 %v866
  %899 = vmatpush1.bf16.msra.mxu0 %v865
  %900 = vmatprep.subr.bf16.mxu0 0
  %901 = vmatpush2.bf16.msra.mxu0 0
  %902 = vmatprep.subr.bf16.mxu0 0
  %903 = vmatpush2.bf16.msra.mxu0 0
  %904 = vmatprep.subr.bf16.mxu0 0
  %905 = vmatpush2.bf16.msra.mxu0 0
  %906 = vmatprep.subr.bf16.mxu0 0
  %907 = vmatpush2.bf16.msra.mxu0 0
  %908 = vmatprep.subr.bf16.mxu0 0
  %909 = vmatpush2.bf16.msra.mxu0 0
  %910 = vmatprep.subr.bf16.mxu0 0
  %911 = vmatpush2.bf16.msra.mxu0 0
  %912 = vmatprep.subr.bf16.mxu0 0
  %913 = vmatpush2.bf16.msra.mxu0 0
  %914 = vmatprep.subr.bf16.mxu0 0
  %915 = vmatpush2.bf16.msra.mxu0 0
  %916 = vmatprep.mubr.bf16.mxu0 0
  %917 = vmatmul.mubr.bf16.gmra.mxu0 %v882
  %v918 = vpop.f32.mrf.mxu0
  %v919 = vadd.f32 0.0, %v918
  %v920 = vpop.f32.mrf.mxu0
  %v921 = vadd.f32 0.0, %v920
  %v922 = vpop.f32.mrf.mxu0
  %v923 = vpop.f32.mrf.mxu0
  %924 = vdwg.mxu0
  %v925 = vadd.f32 %v830, %v919
  %v926 = vadd.f32 %v831, %v921
  %v927 = vxor.u32 %v925, 2147483648
  %v928 = vxor.u32 %v926, 2147483648
  %v929 = vmul.f32 %v927, 1.442695
  %v930 = vpow.pop %v929
  %v931 = vmul.f32 %v928, 1.442695
  %v932 = vpow.pop %v931
  %v933 = vadd.f32 %v930, 1.0
  %v934 = vadd.f32 %v932, 1.0
  %v935 = vrcp.pop %v933
  %v936 = vmul.f32 1.0, %v935
  %v937 = vrcp.pop %v934
  %v938 = vmul.f32 1.0, %v937
  %v939 = vtanh.pop %v926
  %v940 = vmul.f32 %v936, %v822
  %942 = vrot.lane.b32.xlu0 %v939, 64
  %v943 = vpop.permute.xlu0 %942
  %v945 = vmul.f32 %v936, %v943
  %947 = vrot.lane.b32.xlu0 %v945, 64
  %v948 = vpop.permute.xlu0 %947
  %v950 = vadd.f32 %v940, %v948
  %v951 = vtanh.pop %v950
  %953 = vrot.lane.b32.xlu0 %v951, 64
  %v954 = vpop.permute.xlu0 %953
  %v956 = vmul.f32 %v938, %v954
  %957 = vst.msk [vmem:[#allocation3 + $0x28] sm:$0xff] %vm240, %v956
  %v958 = vld [vmem:[#allocation2 + $0x60] sm:$0xff]
  %v959 = vld [vmem:[#allocation2 + $0x68] sm:$0xff]
  %v960 = vpack.c.bf16 %v956, %v956
  %v961 = vld [vmem:[%s2] sm:$0xff]
  %v962 = vld [vmem:[%s2 + $0x8] sm:$0xff]
  %v963 = vld [vmem:[%s2 + $0x10] sm:$0xff]
  %v964 = vld [vmem:[%s2 + $0x18] sm:$0xff]
  %v965 = vld [vmem:[%s2 + $0x20] sm:$0xff]
  %v966 = vld [vmem:[%s2 + $0x28] sm:$0xff]
  %v967 = vld [vmem:[%s2 + $0x30] sm:$0xff]
  %v968 = vld [vmem:[%s2 + $0x38] sm:$0xff]
  %v977 = vunpack.c.l.b16 %v961
  %v978 = vunpack.c.h.b16 %v961
  %v979 = vunpack.c.l.b16 %v962
  %v980 = vunpack.c.h.b16 %v962
  %v981 = vunpack.c.l.b16 %v963
  %v982 = vunpack.c.h.b16 %v963
  %v983 = vunpack.c.l.b16 %v964
  %v984 = vunpack.c.h.b16 %v964
  %v985 = vunpack.c.l.b16 %v965
  %v986 = vunpack.c.h.b16 %v965
  %v987 = vunpack.c.l.b16 %v966
  %v988 = vunpack.c.h.b16 %v966
  %v989 = vunpack.c.l.b16 %v967
  %v990 = vunpack.c.h.b16 %v967
  %v991 = vunpack.c.l.b16 %v968
  %v992 = vunpack.c.h.b16 %v968
  %v993 = vpack.c.b16 %v979, %v977
  %v994 = vpack.c.b16 %v980, %v978
  %v995 = vpack.c.b16 %v983, %v981
  %v996 = vpack.c.b16 %v984, %v982
  %v997 = vpack.c.b16 %v987, %v985
  %v998 = vpack.c.b16 %v988, %v986
  %v999 = vpack.c.b16 %v991, %v989
  %v1000 = vpack.c.b16 %v992, %v990
  %v1010 = vsel %vm240, %v960, 0
  %1012 = vmatprep.subr.bf16.mxu0 0
  %1013 = vmatpush1.bf16.msra.mxu0 0
  %1014 = vmatprep.subr.bf16.mxu0 0
  %1015 = vmatpush1.bf16.msra.mxu0 0
  %1016 = vmatprep.subr.bf16.mxu0 0
  %1017 = vmatpush1.bf16.msra.mxu0 0
  %1018 = vmatprep.subr.bf16.mxu0 0
  %1019 = vmatpush1.bf16.msra.mxu0 0
  %1020 = vmatprep.subr.bf16.mxu0 %v1000
  %1021 = vmatpush1.bf16.msra.mxu0 %v999
  %1022 = vmatprep.subr.bf16.mxu0 %v998
  %1023 = vmatpush1.bf16.msra.mxu0 %v997
  %1024 = vmatprep.subr.bf16.mxu0 %v996
  %1025 = vmatpush1.bf16.msra.mxu0 %v995
  %1026 = vmatprep.subr.bf16.mxu0 %v994
  %1027 = vmatpush1.bf16.msra.mxu0 %v993
  %1028 = vmatprep.subr.bf16.mxu0 0
  %1029 = vmatpush2.bf16.msra.mxu0 0
  %1030 = vmatprep.subr.bf16.mxu0 0
  %1031 = vmatpush2.bf16.msra.mxu0 0
  %1032 = vmatprep.subr.bf16.mxu0 0
  %1033 = vmatpush2.bf16.msra.mxu0 0
  %1034 = vmatprep.subr.bf16.mxu0 0
  %1035 = vmatpush2.bf16.msra.mxu0 0
  %1036 = vmatprep.subr.bf16.mxu0 0
  %1037 = vmatpush2.bf16.msra.mxu0 0
  %1038 = vmatprep.subr.bf16.mxu0 0
  %1039 = vmatpush2.bf16.msra.mxu0 0
  %1040 = vmatprep.subr.bf16.mxu0 0
  %1041 = vmatpush2.bf16.msra.mxu0 0
  %1042 = vmatprep.subr.bf16.mxu0 0
  %1043 = vmatpush2.bf16.msra.mxu0 0
  %1044 = vmatprep.mubr.bf16.mxu0 0
  %1045 = vmatmul.mubr.bf16.gmra.mxu0 %v1010
  %v1046 = vpop.f32.mrf.mxu0
  %v1047 = vadd.f32 0.0, %v1046
  %v1048 = vpop.f32.mrf.mxu0
  %v1049 = vadd.f32 0.0, %v1048
  %v1050 = vpop.f32.mrf.mxu0
  %v1051 = vpop.f32.mrf.mxu0
  %1052 = vdwg.mxu0
  %v1053 = vadd.f32 %v958, %v1047
  %v1054 = vadd.f32 %v959, %v1049
  %v1055 = vxor.u32 %v1053, 2147483648
  %v1056 = vxor.u32 %v1054, 2147483648
  %v1057 = vmul.f32 %v1055, 1.442695
  %v1058 = vpow.pop %v1057
  %v1059 = vmul.f32 %v1056, 1.442695
  %v1060 = vpow.pop %v1059
  %v1061 = vadd.f32 %v1058, 1.0
  %v1062 = vadd.f32 %v1060, 1.0
  %v1063 = vrcp.pop %v1061
  %v1064 = vmul.f32 1.0, %v1063
  %v1065 = vrcp.pop %v1062
  %v1066 = vmul.f32 1.0, %v1065
  %v1067 = vtanh.pop %v1054
  %v1068 = vmul.f32 %v1064, %v950
  %1070 = vrot.lane.b32.xlu0 %v1067, 64
  %v1071 = vpop.permute.xlu0 %1070
  %v1073 = vmul.f32 %v1064, %v1071
  %1075 = vrot.lane.b32.xlu0 %v1073, 64
  %v1076 = vpop.permute.xlu0 %1075
  %v1078 = vadd.f32 %v1068, %v1076
  %v1079 = vtanh.pop %v1078
  %1081 = vrot.lane.b32.xlu0 %v1079, 64
  %v1082 = vpop.permute.xlu0 %1081
  %v1084 = vmul.f32 %v1066, %v1082
  %1085 = vst.msk [vmem:[#allocation3 + $0x30] sm:$0xff] %vm240, %v1084
  %v1086 = vld [vmem:[#allocation2 + $0x70] sm:$0xff]
  %v1087 = vld [vmem:[#allocation2 + $0x78] sm:$0xff]
  %v1088 = vpack.c.bf16 %v1084, %v1084
  %v1089 = vld [vmem:[%s2] sm:$0xff]
  %v1090 = vld [vmem:[%s2 + $0x8] sm:$0xff]
  %v1091 = vld [vmem:[%s2 + $0x10] sm:$0xff]
  %v1092 = vld [vmem:[%s2 + $0x18] sm:$0xff]
  %v1093 = vld [vmem:[%s2 + $0x20] sm:$0xff]
  %v1094 = vld [vmem:[%s2 + $0x28] sm:$0xff]
  %v1095 = vld [vmem:[%s2 + $0x30] sm:$0xff]
  %v1096 = vld [vmem:[%s2 + $0x38] sm:$0xff]
  %v1105 = vunpack.c.l.b16 %v1089
  %v1106 = vunpack.c.h.b16 %v1089
  %v1107 = vunpack.c.l.b16 %v1090
  %v1108 = vunpack.c.h.b16 %v1090
  %v1109 = vunpack.c.l.b16 %v1091
  %v1110 = vunpack.c.h.b16 %v1091
  %v1111 = vunpack.c.l.b16 %v1092
  %v1112 = vunpack.c.h.b16 %v1092
  %v1113 = vunpack.c.l.b16 %v1093
  %v1114 = vunpack.c.h.b16 %v1093
  %v1115 = vunpack.c.l.b16 %v1094
  %v1116 = vunpack.c.h.b16 %v1094
  %v1117 = vunpack.c.l.b16 %v1095
  %v1118 = vunpack.c.h.b16 %v1095
  %v1119 = vunpack.c.l.b16 %v1096
  %v1120 = vunpack.c.h.b16 %v1096
  %v1121 = vpack.c.b16 %v1107, %v1105
  %v1122 = vpack.c.b16 %v1108, %v1106
  %v1123 = vpack.c.b16 %v1111, %v1109
  %v1124 = vpack.c.b16 %v1112, %v1110
  %v1125 = vpack.c.b16 %v1115, %v1113
  %v1126 = vpack.c.b16 %v1116, %v1114
  %v1127 = vpack.c.b16 %v1119, %v1117
  %v1128 = vpack.c.b16 %v1120, %v1118
  %v1138 = vsel %vm240, %v1088, 0
  %1140 = vmatprep.subr.bf16.mxu0 0
  %1141 = vmatpush1.bf16.msra.mxu0 0
  %1142 = vmatprep.subr.bf16.mxu0 0
  %1143 = vmatpush1.bf16.msra.mxu0 0
  %1144 = vmatprep.subr.bf16.mxu0 0
  %1145 = vmatpush1.bf16.msra.mxu0 0
  %1146 = vmatprep.subr.bf16.mxu0 0
  %1147 = vmatpush1.bf16.msra.mxu0 0
  %1148 = vmatprep.subr.bf16.mxu0 %v1128
  %1149 = vmatpush1.bf16.msra.mxu0 %v1127
  %1150 = vmatprep.subr.bf16.mxu0 %v1126
  %1151 = vmatpush1.bf16.msra.mxu0 %v1125
  %1152 = vmatprep.subr.bf16.mxu0 %v1124
  %1153 = vmatpush1.bf16.msra.mxu0 %v1123
  %1154 = vmatprep.subr.bf16.mxu0 %v1122
  %1155 = vmatpush1.bf16.msra.mxu0 %v1121
  %1156 = vmatprep.subr.bf16.mxu0 0
  %1157 = vmatpush2.bf16.msra.mxu0 0
  %1158 = vmatprep.subr.bf16.mxu0 0
  %1159 = vmatpush2.bf16.msra.mxu0 0
  %1160 = vmatprep.subr.bf16.mxu0 0
  %1161 = vmatpush2.bf16.msra.mxu0 0
  %1162 = vmatprep.subr.bf16.mxu0 0
  %1163 = vmatpush2.bf16.msra.mxu0 0
  %1164 = vmatprep.subr.bf16.mxu0 0
  %1165 = vmatpush2.bf16.msra.mxu0 0
  %1166 = vmatprep.subr.bf16.mxu0 0
  %1167 = vmatpush2.bf16.msra.mxu0 0
  %1168 = vmatprep.subr.bf16.mxu0 0
  %1169 = vmatpush2.bf16.msra.mxu0 0
  %1170 = vmatprep.subr.bf16.mxu0 0
  %1171 = vmatpush2.bf16.msra.mxu0 0
  %1172 = vmatprep.mubr.bf16.mxu0 0
  %1173 = vmatmul.mubr.bf16.gmra.mxu0 %v1138
  %v1174 = vpop.f32.mrf.mxu0
  %v1175 = vadd.f32 0.0, %v1174
  %v1176 = vpop.f32.mrf.mxu0
  %v1177 = vadd.f32 0.0, %v1176
  %v1178 = vpop.f32.mrf.mxu0
  %v1179 = vpop.f32.mrf.mxu0
  %1180 = vdwg.mxu0
  %v1181 = vadd.f32 %v1086, %v1175
  %v1182 = vadd.f32 %v1087, %v1177
  %v1183 = vxor.u32 %v1181, 2147483648
  %v1184 = vxor.u32 %v1182, 2147483648
  %v1185 = vmul.f32 %v1183, 1.442695
  %v1186 = vpow.pop %v1185
  %v1187 = vmul.f32 %v1184, 1.442695
  %v1188 = vpow.pop %v1187
  %v1189 = vadd.f32 %v1186, 1.0
  %v1190 = vadd.f32 %v1188, 1.0
  %v1191 = vrcp.pop %v1189
  %v1192 = vmul.f32 1.0, %v1191
  %v1193 = vrcp.pop %v1190
  %v1194 = vmul.f32 1.0, %v1193
  %v1195 = vtanh.pop %v1182
  %v1196 = vmul.f32 %v1192, %v1078
  %1198 = vrot.lane.b32.xlu0 %v1195, 64
  %v1199 = vpop.permute.xlu0 %1198
  %v1201 = vmul.f32 %v1192, %v1199
  %1203 = vrot.lane.b32.xlu0 %v1201, 64
  %v1204 = vpop.permute.xlu0 %1203
  %v1206 = vadd.f32 %v1196, %v1204
  %v1207 = vtanh.pop %v1206
  %1209 = vrot.lane.b32.xlu0 %v1207, 64
  %v1210 = vpop.permute.xlu0 %1209
  %v1212 = vmul.f32 %v1194, %v1210
  %1213 = vst.msk [vmem:[#allocation3 + $0x38] sm:$0xff] %vm240, %v1212
  %v1214 = vld [vmem:[#allocation3] sm:$0xff]
  %v1215 = vld [vmem:[#allocation3 + $0x8] sm:$0xff]
  %v1216 = vld [vmem:[#allocation3 + $0x10] sm:$0xff]
  %v1217 = vld [vmem:[#allocation3 + $0x18] sm:$0xff]
  %v1218 = vld [vmem:[#allocation3 + $0x20] sm:$0xff]
  %v1219 = vld [vmem:[#allocation3 + $0x28] sm:$0xff]
  %v1220 = vld [vmem:[#allocation3 + $0x30] sm:$0xff]
  %v1221 = vld [vmem:[#allocation3 + $0x38] sm:$0xff]
  %v1222 = vpack.c.bf16 %v1215, %v1214
  %v1223 = vpack.c.bf16 %v1217, %v1216
  %v1224 = vpack.c.bf16 %v1219, %v1218
  %v1225 = vpack.c.bf16 %v1221, %v1220
  %v1226 = vld [vmem:[%s4] sm:$0xf]
  %v1227 = vld [vmem:[%s4 + $0x4] sm:$0xf]
  %v1228 = vld [vmem:[%s4 + $0x8] sm:$0xf]
  %v1229 = vld [vmem:[%s4 + $0xc] sm:$0xf]
  %v1230 = vld [vmem:[%s4 + $0x10] sm:$0xf]
  %v1231 = vld [vmem:[%s4 + $0x14] sm:$0xf]
  %v1232 = vld [vmem:[%s4 + $0x18] sm:$0xf]
  %v1233 = vld [vmem:[%s4 + $0x1c] sm:$0xf]
  %v1234 = vld [vmem:[%s5] sm:$0x1]
  %v1236 = vlaneseq
  %v1237 = vshrl.u32 %v1236, 7
  %v1238 = vsub.s32 0, %v1237
  %v1239 = vrot.slane %v1234, %v1238
  %v1249 = vunpack.c.l.b16 %v1226
  %v1250 = vunpack.c.l.b16 %v1227
  %v1251 = vunpack.c.l.b16 %v1228
  %v1252 = vunpack.c.l.b16 %v1229
  %v1253 = vunpack.c.l.b16 %v1230
  %v1254 = vunpack.c.l.b16 %v1231
  %v1255 = vunpack.c.l.b16 %v1232
  %v1256 = vunpack.c.l.b16 %v1233
  %v1257 = vpack.c.b16 %v1250, %v1249
  %v1258 = vpack.c.b16 %v1252, %v1251
  %v1259 = vpack.c.b16 %v1254, %v1253
  %v1260 = vpack.c.b16 %v1256, %v1255
  %v1266 = vsel %vm240, %v1222, 0
  %v1269 = vsel %vm240, %v1223, 0
  %v1272 = vsel %vm240, %v1224, 0
  %v1275 = vsel %vm240, %v1225, 0
  %1277 = vmatprep.subr.bf16.mxu0 0
  %1278 = vmatpush1.bf16.msra.mxu0 0
  %1279 = vmatprep.subr.bf16.mxu0 0
  %1280 = vmatpush1.bf16.msra.mxu0 0
  %1281 = vmatprep.subr.bf16.mxu0 0
  %1282 = vmatpush1.bf16.msra.mxu0 0
  %1283 = vmatprep.subr.bf16.mxu0 0
  %1284 = vmatpush1.bf16.msra.mxu0 0
  %1285 = vmatprep.subr.bf16.mxu0 0
  %1286 = vmatpush1.bf16.msra.mxu0 %v1260
  %1287 = vmatprep.subr.bf16.mxu0 0
  %1288 = vmatpush1.bf16.msra.mxu0 %v1259
  %1289 = vmatprep.subr.bf16.mxu0 0
  %1290 = vmatpush1.bf16.msra.mxu0 %v1258
  %1291 = vmatprep.subr.bf16.mxu0 0
  %1292 = vmatpush1.bf16.msra.mxu0 %v1257
  %1293 = vmatprep.subr.bf16.mxu0 0
  %1294 = vmatpush2.bf16.msra.mxu0 0
  %1295 = vmatprep.subr.bf16.mxu0 0
  %1296 = vmatpush2.bf16.msra.mxu0 0
  %1297 = vmatprep.subr.bf16.mxu0 0
  %1298 = vmatpush2.bf16.msra.mxu0 0
  %1299 = vmatprep.subr.bf16.mxu0 0
  %1300 = vmatpush2.bf16.msra.mxu0 0
  %1301 = vmatprep.subr.bf16.mxu0 0
  %1302 = vmatpush2.bf16.msra.mxu0 0
  %1303 = vmatprep.subr.bf16.mxu0 0
  %1304 = vmatpush2.bf16.msra.mxu0 0
  %1305 = vmatprep.subr.bf16.mxu0 0
  %1306 = vmatpush2.bf16.msra.mxu0 0
  %1307 = vmatprep.subr.bf16.mxu0 0
  %1308 = vmatpush2.bf16.msra.mxu0 0
  %1309 = vmatprep.mubr.bf16.mxu0 0
  %1310 = vmatmul.mubr.bf16.gmra.mxu0 %v1266
  %v1311 = vpop.f32.mrf.mxu0
  %v1312 = vadd.f32 %v1239, %v1311
  %v1313 = vpop.f32.mrf.mxu0
  %v1314 = vpop.f32.mrf.mxu0
  %v1315 = vadd.f32 %v1239, %v1314
  %v1316 = vpop.f32.mrf.mxu0
  %1317 = vmatprep.mubr.bf16.mxu0 0
  %1318 = vmatmul.mubr.bf16.gmra.mxu0 %v1269
  %v1319 = vpop.f32.mrf.mxu0
  %v1320 = vadd.f32 %v1239, %v1319
  %v1321 = vpop.f32.mrf.mxu0
  %v1322 = vpop.f32.mrf.mxu0
  %v1323 = vadd.f32 %v1239, %v1322
  %v1324 = vpop.f32.mrf.mxu0
  %1325 = vmatprep.mubr.bf16.mxu0 0
  %1326 = vmatmul.mubr.bf16.gmra.mxu0 %v1272
  %v1327 = vpop.f32.mrf.mxu0
  %v1328 = vadd.f32 %v1239, %v1327
  %v1329 = vpop.f32.mrf.mxu0
  %v1330 = vpop.f32.mrf.mxu0
  %v1331 = vadd.f32 %v1239, %v1330
  %v1332 = vpop.f32.mrf.mxu0
  %1333 = vmatprep.mubr.bf16.mxu0 0
  %1334 = vmatmul.mubr.bf16.gmra.mxu0 %v1275
  %v1335 = vpop.f32.mrf.mxu0
  %v1336 = vadd.f32 %v1239, %v1335
  %v1337 = vpop.f32.mrf.mxu0
  %v1338 = vpop.f32.mrf.mxu0
  %v1339 = vadd.f32 %v1239, %v1338
  %v1340 = vpop.f32.mrf.mxu0
  %1341 = vdwg.mxu0
  %v1342 = vmax.f32 %v1312, 0.0
  %v1343 = vmax.f32 %v1315, 0.0
  %v1344 = vmax.f32 %v1320, 0.0
  %v1345 = vmax.f32 %v1323, 0.0
  %v1346 = vmax.f32 %v1328, 0.0
  %v1347 = vmax.f32 %v1331, 0.0
  %v1348 = vmax.f32 %v1336, 0.0
  %v1349 = vmax.f32 %v1339, 0.0
  %v1350 = vpack.c.bf16 %v1343, %v1342
  %v1351 = vpack.c.bf16 %v1345, %v1344
  %v1352 = vpack.c.bf16 %v1347, %v1346
  %v1353 = vpack.c.bf16 %v1349, %v1348
  %v1354 = vld [vmem:[%s6] sm:$0xf]
  %v1355 = vld [vmem:[%s6 + $0x4] sm:$0xf]
  %v1356 = vld [vmem:[%s6 + $0x8] sm:$0xf]
  %v1357 = vld [vmem:[%s6 + $0xc] sm:$0xf]
  %v1358 = vld [vmem:[%s7] sm:$0x1]
  %v1360 = vlaneseq
  %v1361 = vshrl.u32 %v1360, 7
  %v1362 = vsub.s32 0, %v1361
  %v1363 = vrot.slane %v1358, %v1362
  %v1369 = vunpack.c.l.b16 %v1354
  %v1370 = vunpack.c.l.b16 %v1355
  %v1371 = vunpack.c.l.b16 %v1356
  %v1372 = vunpack.c.l.b16 %v1357
  %v1373 = vpack.c.b16 %v1370, %v1369
  %v1374 = vpack.c.b16 %v1372, %v1371
  %vm1377 = vcmask 261120
  %v1379 = vsel %vm1377, %v1350, 0
  %v1382 = vsel %vm1377, %v1351, 0
  %v1385 = vsel %vm1377, %v1352, 0
  %v1388 = vsel %vm1377, %v1353, 0
  %1390 = vmatprep.subr.bf16.mxu0 0
  %1391 = vmatpush1.bf16.msra.mxu0 0
  %1392 = vmatprep.subr.bf16.mxu0 0
  %1393 = vmatpush1.bf16.msra.mxu0 0
  %1394 = vmatprep.subr.bf16.mxu0 0
  %1395 = vmatpush1.bf16.msra.mxu0 0
  %1396 = vmatprep.subr.bf16.mxu0 0
  %1397 = vmatpush1.bf16.msra.mxu0 0
  %1398 = vmatprep.subr.bf16.mxu0 0
  %1399 = vmatpush1.bf16.msra.mxu0 0
  %1400 = vmatprep.subr.bf16.mxu0 0
  %1401 = vmatpush1.bf16.msra.mxu0 0
  %1402 = vmatprep.subr.bf16.mxu0 0
  %1403 = vmatpush1.bf16.msra.mxu0 %v1374
  %1404 = vmatprep.subr.bf16.mxu0 0
  %1405 = vmatpush1.bf16.msra.mxu0 %v1373
  %1406 = vmatprep.subr.bf16.mxu0 0
  %1407 = vmatpush2.bf16.msra.mxu0 0
  %1408 = vmatprep.subr.bf16.mxu0 0
  %1409 = vmatpush2.bf16.msra.mxu0 0
  %1410 = vmatprep.subr.bf16.mxu0 0
  %1411 = vmatpush2.bf16.msra.mxu0 0
  %1412 = vmatprep.subr.bf16.mxu0 0
  %1413 = vmatpush2.bf16.msra.mxu0 0
  %1414 = vmatprep.subr.bf16.mxu0 0
  %1415 = vmatpush2.bf16.msra.mxu0 0
  %1416 = vmatprep.subr.bf16.mxu0 0
  %1417 = vmatpush2.bf16.msra.mxu0 0
  %1418 = vmatprep.subr.bf16.mxu0 0
  %1419 = vmatpush2.bf16.msra.mxu0 0
  %1420 = vmatprep.subr.bf16.mxu0 0
  %1421 = vmatpush2.bf16.msra.mxu0 0
  %1422 = vmatprep.mubr.bf16.mxu0 0
  %1423 = vmatmul.mubr.bf16.gmra.mxu0 %v1379
  %v1424 = vpop.f32.mrf.mxu0
  %v1425 = vadd.f32 %v1363, %v1424
  %v1426 = vpop.f32.mrf.mxu0
  %v1427 = vpop.f32.mrf.mxu0
  %v1428 = vadd.f32 %v1363, %v1427
  %v1429 = vpop.f32.mrf.mxu0
  %1430 = vmatprep.mubr.bf16.mxu0 0
  %1431 = vmatmul.mubr.bf16.gmra.mxu0 %v1382
  %v1432 = vpop.f32.mrf.mxu0
  %v1433 = vadd.f32 %v1363, %v1432
  %v1434 = vpop.f32.mrf.mxu0
  %v1435 = vpop.f32.mrf.mxu0
  %v1436 = vadd.f32 %v1363, %v1435
  %v1437 = vpop.f32.mrf.mxu0
  %1438 = vmatprep.mubr.bf16.mxu0 0
  %1439 = vmatmul.mubr.bf16.gmra.mxu0 %v1385
  %v1440 = vpop.f32.mrf.mxu0
  %v1441 = vadd.f32 %v1363, %v1440
  %v1442 = vpop.f32.mrf.mxu0
  %v1443 = vpop.f32.mrf.mxu0
  %v1444 = vadd.f32 %v1363, %v1443
  %v1445 = vpop.f32.mrf.mxu0
  %1446 = vmatprep.mubr.bf16.mxu0 0
  %1447 = vmatmul.mubr.bf16.gmra.mxu0 %v1388
  %v1448 = vpop.f32.mrf.mxu0
  %v1449 = vadd.f32 %v1363, %v1448
  %v1450 = vpop.f32.mrf.mxu0
  %v1451 = vpop.f32.mrf.mxu0
  %v1452 = vadd.f32 %v1363, %v1451
  %v1453 = vpop.f32.mrf.mxu0
  %1454 = vdwg.mxu0
  %v1455 = vmax.f32 %v1425, 0.0
  %v1456 = vmax.f32 %v1428, 0.0
  %v1457 = vmax.f32 %v1433, 0.0
  %v1458 = vmax.f32 %v1436, 0.0
  %v1459 = vmax.f32 %v1441, 0.0
  %v1460 = vmax.f32 %v1444, 0.0
  %v1461 = vmax.f32 %v1449, 0.0
  %v1462 = vmax.f32 %v1452, 0.0
  %v1463 = vpack.c.bf16 %v1456, %v1455
  %v1464 = vpack.c.bf16 %v1458, %v1457
  %v1465 = vpack.c.bf16 %v1460, %v1459
  %v1466 = vpack.c.bf16 %v1462, %v1461
  %v1467 = vld [vmem:[%s8] sm:$0xf]
  %v1468 = vld [vmem:[%s8 + $0x4] sm:$0xf]
  %v1469 = vld [vmem:[%s8 + $0x8] sm:$0xf]
  %v1470 = vld [vmem:[%s8 + $0xc] sm:$0xf]
  %v1471 = vld [vmem:[%s8 + $0x10] sm:$0xf]
  %v1472 = vld [vmem:[%s8 + $0x14] sm:$0xf]
  %v1473 = vld [vmem:[%s8 + $0x18] sm:$0xf]
  %v1474 = vld [vmem:[%s8 + $0x1c] sm:$0xf]
  %v1475 = vld [vmem:[%s9] sm:$0x1]
  %v1477 = vlaneseq
  %v1478 = vshrl.u32 %v1477, 7
  %v1479 = vsub.s32 0, %v1478
  %v1480 = vrot.slane %v1475, %v1479
  %v1490 = vunpack.c.l.b16 %v1467
  %v1491 = vunpack.c.l.b16 %v1468
  %v1492 = vunpack.c.l.b16 %v1469
  %v1493 = vunpack.c.l.b16 %v1470
  %v1494 = vunpack.c.l.b16 %v1471
  %v1495 = vunpack.c.l.b16 %v1472
  %v1496 = vunpack.c.l.b16 %v1473
  %v1497 = vunpack.c.l.b16 %v1474
  %v1498 = vpack.c.b16 %v1491, %v1490
  %v1499 = vpack.c.b16 %v1493, %v1492
  %v1500 = vpack.c.b16 %v1495, %v1494
  %v1501 = vpack.c.b16 %v1497, %v1496
  %v1507 = vsel %vm240, %v1463, 0
  %v1510 = vsel %vm240, %v1464, 0
  %v1513 = vsel %vm240, %v1465, 0
  %v1516 = vsel %vm240, %v1466, 0
  %1518 = vmatprep.subr.bf16.mxu0 0
  %1519 = vmatpush1.bf16.msra.mxu0 0
  %1520 = vmatprep.subr.bf16.mxu0 0
  %1521 = vmatpush1.bf16.msra.mxu0 0
  %1522 = vmatprep.subr.bf16.mxu0 0
  %1523 = vmatpush1.bf16.msra.mxu0 0
  %1524 = vmatprep.subr.bf16.mxu0 0
  %1525 = vmatpush1.bf16.msra.mxu0 0
  %1526 = vmatprep.subr.bf16.mxu0 0
  %1527 = vmatpush1.bf16.msra.mxu0 %v1501
  %1528 = vmatprep.subr.bf16.mxu0 0
  %1529 = vmatpush1.bf16.msra.mxu0 %v1500
  %1530 = vmatprep.subr.bf16.mxu0 0
  %1531 = vmatpush1.bf16.msra.mxu0 %v1499
  %1532 = vmatprep.subr.bf16.mxu0 0
  %1533 = vmatpush1.bf16.msra.mxu0 %v1498
  %1534 = vmatprep.subr.bf16.mxu0 0
  %1535 = vmatpush2.bf16.msra.mxu0 0
  %1536 = vmatprep.subr.bf16.mxu0 0
  %1537 = vmatpush2.bf16.msra.mxu0 0
  %1538 = vmatprep.subr.bf16.mxu0 0
  %1539 = vmatpush2.bf16.msra.mxu0 0
  %1540 = vmatprep.subr.bf16.mxu0 0
  %1541 = vmatpush2.bf16.msra.mxu0 0
  %1542 = vmatprep.subr.bf16.mxu0 0
  %1543 = vmatpush2.bf16.msra.mxu0 0
  %1544 = vmatprep.subr.bf16.mxu0 0
  %1545 = vmatpush2.bf16.msra.mxu0 0
  %1546 = vmatprep.subr.bf16.mxu0 0
  %1547 = vmatpush2.bf16.msra.mxu0 0
  %1548 = vmatprep.subr.bf16.mxu0 0
  %1549 = vmatpush2.bf16.msra.mxu0 0
  %1550 = vmatprep.mubr.bf16.mxu0 0
  %1551 = vmatmul.mubr.bf16.gmra.mxu0 %v1507
  %v1552 = vpop.f32.mrf.mxu0
  %v1553 = vadd.f32 %v1480, %v1552
  %v1554 = vpop.f32.mrf.mxu0
  %v1555 = vpop.f32.mrf.mxu0
  %v1556 = vadd.f32 %v1480, %v1555
  %v1557 = vpop.f32.mrf.mxu0
  %1558 = vmatprep.mubr.bf16.mxu0 0
  %1559 = vmatmul.mubr.bf16.gmra.mxu0 %v1510
  %v1560 = vpop.f32.mrf.mxu0
  %v1561 = vadd.f32 %v1480, %v1560
  %v1562 = vpop.f32.mrf.mxu0
  %v1563 = vpop.f32.mrf.mxu0
  %v1564 = vadd.f32 %v1480, %v1563
  %v1565 = vpop.f32.mrf.mxu0
  %1566 = vmatprep.mubr.bf16.mxu0 0
  %1567 = vmatmul.mubr.bf16.gmra.mxu0 %v1513
  %v1568 = vpop.f32.mrf.mxu0
  %v1569 = vadd.f32 %v1480, %v1568
  %v1570 = vpop.f32.mrf.mxu0
  %v1571 = vpop.f32.mrf.mxu0
  %v1572 = vadd.f32 %v1480, %v1571
  %v1573 = vpop.f32.mrf.mxu0
  %1574 = vmatprep.mubr.bf16.mxu0 0
  %1575 = vmatmul.mubr.bf16.gmra.mxu0 %v1516
  %v1576 = vpop.f32.mrf.mxu0
  %v1577 = vadd.f32 %v1480, %v1576
  %v1578 = vpop.f32.mrf.mxu0
  %v1579 = vpop.f32.mrf.mxu0
  %v1580 = vadd.f32 %v1480, %v1579
  %v1581 = vpop.f32.mrf.mxu0
  %1582 = vdwg.mxu0
  %vm1583 = vcmask 64512
  %1584 = vst.msk [vmem:[%s10] sm:$0xff] %vm1583, %v1553
  %1585 = vst.msk [vmem:[%s10 + $0x8] sm:$0xff] %vm1583, %v1556
  %1586 = vst.msk [vmem:[%s10 + $0x10] sm:$0xff] %vm1583, %v1561
  %1587 = vst.msk [vmem:[%s10 + $0x18] sm:$0xff] %vm1583, %v1564
  %1588 = vst.msk [vmem:[%s10 + $0x20] sm:$0xff] %vm1583, %v1569
  %1589 = vst.msk [vmem:[%s10 + $0x28] sm:$0xff] %vm1583, %v1572
  %1590 = vst.msk [vmem:[%s10 + $0x30] sm:$0xff] %vm1583, %v1577
  %1591 = vst.msk [vmem:[%s10 + $0x38] sm:$0xff] %vm1583, %v1580
  // Predicated region
  $region42: #{tpu_custom_call.1} parent=0 // pred_check
    _
  $region43: #{tpu_custom_call.1} parent=0 // pred_check_branch
    %1593 = sbr.rel (0) target = $region45
  $region44: #{tpu_custom_call.1} parent=0 // pred_region
    _
  $region45: #{tpu_custom_call.1} parent=0 // pred_fallthru
    _
  // Predicated region
  $region46: #{tpu_custom_call.1} parent=0 // pred_check
    _
  $region47: #{tpu_custom_call.1} parent=0 // pred_check_branch
    %1595 = sbr.rel (0) target = $region49
  $region48: #{tpu_custom_call.1} parent=0 // pred_region
    _
  $region49: #{tpu_custom_call.1} parent=0 // pred_fallthru
    _

</llo_original>
